<compile_context>
chip_gen: v5e
topology: v5e:2x2
jax: 0.10.0
libtpu: 0.0.40
codegen_flags: <defaults>
</compile_context>

<pallas_src>
import functools

import jax
import jax.numpy as jnp
from jax import lax
from jax.experimental import pallas as pl
from jax.experimental.pallas import tpu as pltpu


def _round_up(a: int, b: int) -> int:
    return ((a + b - 1) // b) * b


def ffn_kernel(x_ref, w1_ref, b1_ref, w2_ref, b2_ref, gamma_ref, beta_ref,
               o_ref, acc_ref, *, eps: float):
    """One (row-tile i, ff-tile f) grid step.

    x_ref:  (tm, D)  input rows (kept in input dtype -> bf16 MXU fast path)
    w1_ref: (D, tf)  W1^T column slab      b1_ref: (1, tf)
    w2_ref: (tf, D)  W2^T row slab         b2_ref/gamma_ref/beta_ref: (1, D)
    acc_ref:(tm, D)  f32 accumulator over the ff (f) grid axis
    """
    f = pl.program_id(1)

    @pl.when(f == 0)
    def _init():
        acc_ref[...] = jnp.zeros_like(acc_ref)

    x = x_ref[...]  # operand dtype preserved (bf16 or f32); no f32 upcast

    # h_f = relu(x @ W1[:, f-slice] + b1[f-slice]); f32 accumulation on MXU.
    h = jnp.dot(x, w1_ref[...], preferred_element_type=jnp.float32)
    h = jnp.maximum(h + b1_ref[...].astype(jnp.float32), 0.0)

    # Partial second matmul: acc += h_f @ W2[f-slice, :]  (f32 accumulator).
    acc_ref[...] += jnp.dot(h.astype(x.dtype), w2_ref[...],
                            preferred_element_type=jnp.float32)

    @pl.when(f == pl.num_programs(1) - 1)
    def _finalize():
        # bias2 + ReLU + residual + LayerNorm, all in f32.
        y = jnp.maximum(acc_ref[...] + b2_ref[...].astype(jnp.float32), 0.0)
        # TODO(synk): dropout is identity (eval mode); training-mode dropout
        # would use pltpu.prng_seed / prng_random_bits here.
        z = y + x.astype(jnp.float32)
        mean = jnp.mean(z, axis=-1, keepdims=True)
        var = jnp.mean(jnp.square(z - mean), axis=-1, keepdims=True)
        zn = (z - mean) * lax.rsqrt(var + eps)
        o_ref[...] = (zn * gamma_ref[...].astype(jnp.float32)
                      + beta_ref[...].astype(jnp.float32)).astype(o_ref.dtype)


def position_wise_ffn(x, w1, b1, w2, b2, gamma, beta, *,
                      tm=256, tf=256, eps=1e-6,
                      vmem_limit_bytes=48 * 1024 * 1024):
    """x: [B, S, D]; w1: [D, F] (= W1.T); w2: [F, D] (= W2.T)."""
    B, S, D = x.shape
    F = w1.shape[1]
    M = B * S

    # Row tile: large / MXU-friendly, multiple of 8 sublanes; pad rows if M
    # is not a multiple (padded rows are sliced off at the end).
    tm = min(tm, _round_up(M, 8))
    Mp = _round_up(M, tm)

    # ff_dim tile: multiple of 128 lanes, else fall back to the whole F.
    if F < tf or F % tf != 0:
        tf = F

    x2 = x.reshape(M, D)
    if Mp != M:
        x2 = jnp.pad(x2, ((0, Mp - M), (0, 0)))

    b1_2 = b1.reshape(1, F)
    b2_2 = b2.reshape(1, D)
    g_2 = gamma.reshape(1, D)
    be_2 = beta.reshape(1, D)

    grid = (Mp // tm, F // tf)

    out2 = pl.pallas_call(
        functools.partial(ffn_kernel, eps=eps),
        out_shape=jax.ShapeDtypeStruct((Mp, D), x.dtype),
        grid_spec=pltpu.PrefetchScalarGridSpec(
            num_scalar_prefetch=0,
            grid=grid,
            in_specs=[
                pl.BlockSpec((tm, D), lambda i, f: (i, 0)),   # x rows (reused across f)
                pl.BlockSpec((D, tf), lambda i, f: (0, f)),   # W1^T column slab
                pl.BlockSpec((1, tf), lambda i, f: (0, f)),   # b1 slab
                pl.BlockSpec((tf, D), lambda i, f: (f, 0)),   # W2^T row slab
                pl.BlockSpec((1, D), lambda i, f: (0, 0)),    # b2 (finalize only)
                pl.BlockSpec((1, D), lambda i, f: (0, 0)),    # LayerNorm gamma
                pl.BlockSpec((1, D), lambda i, f: (0, 0)),    # LayerNorm beta
            ],
            out_specs=pl.BlockSpec((tm, D), lambda i, f: (i, 0)),
            scratch_shapes=[pltpu.VMEM((tm, D), jnp.float32)],
        ),
        compiler_params=pltpu.CompilerParams(
            dimension_semantics=("parallel", "arbitrary"),
            vmem_limit_bytes=vmem_limit_bytes,
        ),
    )(x2, w1, b1_2, w2, b2_2, g_2, be_2)

    if Mp != M:
        out2 = out2[:M]
    return out2.reshape(B, S, D)


def reference_ffn(x, w1, b1, w2, b2, gamma, beta, eps=1e-6):
    """Pure-JAX reference matching the PyTorch forward (eval mode)."""
    h = jnp.maximum(x @ w1 + b1, 0.0)
    y = jnp.maximum(h @ w2 + b2, 0.0)
    z = y + x
    mean = jnp.mean(z, axis=-1, keepdims=True)
    var = jnp.mean(jnp.square(z - mean), axis=-1, keepdims=True)
    return (z - mean) / jnp.sqrt(var + eps) * gamma + beta


if __name__ == "__main__":
    # Lane-aligned small shapes: D and F multiples of 128; M = 512 rows so the
    # parallel row axis gets 2 grid steps (one per TC on v7x) at tm=256.
    batch, seq_len, model_dim, ff_dim = 2, 256, 128, 512

    key = jax.random.PRNGKey(0)
    kx, kw1, kb1, kw2, kb2 = jax.random.split(key, 5)

    x = jax.random.normal(kx, (batch, seq_len, model_dim), dtype=jnp.float32)

    # Deterministic parameter init (uniform, roughly matching nn.Linear scale).
    # Stored transposed relative to PyTorch: w1 = W1.T, w2 = W2.T.
    lim1 = 1.0 / (model_dim ** 0.5)
    lim2 = 1.0 / (ff_dim ** 0.5)
    w1 = jax.random.uniform(kw1, (model_dim, ff_dim), jnp.float32, -lim1, lim1)
    b1 = jax.random.uniform(kb1, (ff_dim,), jnp.float32, -lim1, lim1)
    w2 = jax.random.uniform(kw2, (ff_dim, model_dim), jnp.float32, -lim2, lim2)
    b2 = jax.random.uniform(kb2, (model_dim,), jnp.float32, -lim2, lim2)
    gamma = jnp.ones((model_dim,), jnp.float32)   # LayerNorm weight init
    beta = jnp.zeros((model_dim,), jnp.float32)   # LayerNorm bias init

    ref = reference_ffn(x, w1, b1, w2, b2, gamma, beta)

    # f32 path (tight check).
    out = position_wise_ffn(x, w1, b1, w2, b2, gamma, beta)
    out = jax.block_until_ready(out)
    assert out.shape == (batch, seq_len, model_dim)
    assert jnp.allclose(out, ref, atol=1e-3, rtol=1e-3), "f32 mismatch vs reference"

    # bf16 MXU-operand path (f32 accumulation + f32 LayerNorm inside kernel).
    bf = jnp.bfloat16
    out_bf16 = position_wise_ffn(x.astype(bf), w1.astype(bf), b1.astype(bf),
                                 w2.astype(bf), b2.astype(bf),
                                 gamma.astype(bf), beta.astype(bf))
    out_bf16 = jax.block_until_ready(out_bf16)
    assert out_bf16.shape == (batch, seq_len, model_dim)
    diff = jnp.abs(out_bf16.astype(jnp.float32) - ref)
    assert bool(jnp.all(jnp.isfinite(out_bf16.astype(jnp.float32))))
    assert float(jnp.max(diff)) < 0.25, "bf16 path diverged from f32 reference"

    print("KERNEL_OK")
</pallas_src>

<mosaic_0001>
module attributes {stable_mosaic.version = 11 : i64} {
  func.func @ffn_kernel(%arg0: i32, %arg1: i32, %arg2: memref<256x128xf32, #tpu.memory_space<vmem>>, %arg3: memref<128x256xf32, #tpu.memory_space<vmem>>, %arg4: memref<1x256xf32, #tpu.memory_space<vmem>>, %arg5: memref<256x128xf32, #tpu.memory_space<vmem>>, %arg6: memref<1x128xf32, #tpu.memory_space<vmem>>, %arg7: memref<1x128xf32, #tpu.memory_space<vmem>>, %arg8: memref<1x128xf32, #tpu.memory_space<vmem>>, %arg9: memref<256x128xf32, #tpu.memory_space<vmem>>, %arg10: memref<256x128xf32, #tpu.memory_space<vmem>>) attributes {dimension_semantics = [#tpu.dimension_semantics<parallel>, #tpu.dimension_semantics<arbitrary>], iteration_bounds = array<i64: 2, 2>, scalar_prefetch = 0 : i64, scratch_operands = 1 : i64, tpu.core_type = #tpu.core_type<tc>, window_params = [{transform_indices = @transform_0, window_bounds = array<i64: 256, 128>}, {transform_indices = @transform_1, window_bounds = array<i64: 128, 256>}, {transform_indices = @transform_2, window_bounds = array<i64: 1, 256>}, {transform_indices = @transform_3, window_bounds = array<i64: 256, 128>}, {pipeline_mode = #tpu.pipeline_mode<synchronous>, transform_indices = @transform_4, window_bounds = array<i64: 1, 128>}, {pipeline_mode = #tpu.pipeline_mode<synchronous>, transform_indices = @transform_5, window_bounds = array<i64: 1, 128>}, {pipeline_mode = #tpu.pipeline_mode<synchronous>, transform_indices = @transform_6, window_bounds = array<i64: 1, 128>}, {transform_indices = @transform_7, window_bounds = array<i64: 256, 128>}]} {
    %c0_i32 = arith.constant 0 : i32
    %0 = arith.cmpi eq, %arg1, %c0_i32 : i32
    %1 = arith.extui %0 : i1 to i32
    %c0_i32_0 = arith.constant 0 : i32
    %2 = arith.cmpi ne, %1, %c0_i32_0 : i32
    scf.if %2 {
      %cst_15 = arith.constant 0.000000e+00 : f32
      %19 = vector.broadcast %cst_15 : f32 to vector<256x128xf32>
      %c0_16 = arith.constant 0 : index
      %c0_17 = arith.constant 0 : index
      %20 = vector.load %arg10[%c0_16, %c0_17] : memref<256x128xf32, #tpu.memory_space<vmem>>, vector<256x128xf32>
      tpu.vector_store %arg10[%c0_16, %c0_17], %19 {strides = array<i32>} : memref<256x128xf32, #tpu.memory_space<vmem>>, vector<256x128xf32>,
    } else {
    }
    %c0 = arith.constant 0 : index
    %c0_1 = arith.constant 0 : index
    %3 = vector.load %arg2[%c0, %c0_1] : memref<256x128xf32, #tpu.memory_space<vmem>>, vector<256x128xf32>
    %c0_2 = arith.constant 0 : index
    %c0_3 = arith.constant 0 : index
    %4 = vector.load %arg3[%c0_2, %c0_3] : memref<128x256xf32, #tpu.memory_space<vmem>>, vector<128x256xf32>
    %cst = arith.constant dense<0.000000e+00> : vector<256x256xf32>
    %5 = tpu.matmul %3, %4, %cst {dimension_numbers = #tpu.dot_dimension_numbers<[1], [0], [0], [1], [0, 0, 1, 1], [], []>} : vector<256x128xf32>, vector<128x256xf32>, vector<256x256xf32> -> vector<256x256xf32>
    %c0_4 = arith.constant 0 : index
    %c0_5 = arith.constant 0 : index
    %6 = vector.load %arg4[%c0_4, %c0_5] : memref<1x256xf32, #tpu.memory_space<vmem>>, vector<1x256xf32>
    %7 = vector.broadcast %6 : vector<1x256xf32> to vector<256x256xf32>
    %8 = arith.addf %5, %7 : vector<256x256xf32>
    %cst_6 = arith.constant 0.000000e+00 : f32
    %9 = vector.broadcast %cst_6 : f32 to vector<256x256xf32>
    %10 = arith.maximumf %8, %9 : vector<256x256xf32>
    %c0_7 = arith.constant 0 : index
    %c0_8 = arith.constant 0 : index
    %11 = vector.load %arg10[%c0_7, %c0_8] : memref<256x128xf32, #tpu.memory_space<vmem>>, vector<256x128xf32>
    %c0_9 = arith.constant 0 : index
    %c0_10 = arith.constant 0 : index
    %12 = vector.load %arg5[%c0_9, %c0_10] : memref<256x128xf32, #tpu.memory_space<vmem>>, vector<256x128xf32>
    %cst_11 = arith.constant dense<0.000000e+00> : vector<256x128xf32>
    %13 = tpu.matmul %10, %12, %cst_11 {dimension_numbers = #tpu.dot_dimension_numbers<[1], [0], [0], [1], [0, 0, 1, 1], [], []>} : vector<256x256xf32>, vector<256x128xf32>, vector<256x128xf32> -> vector<256x128xf32>
    %14 = arith.addf %11, %13 : vector<256x128xf32>
    %c0_12 = arith.constant 0 : index
    %c0_13 = arith.constant 0 : index
    %15 = vector.load %arg10[%c0_12, %c0_13] : memref<256x128xf32, #tpu.memory_space<vmem>>, vector<256x128xf32>
    tpu.vector_store %arg10[%c0_12, %c0_13], %14 {strides = array<i32>} : memref<256x128xf32, #tpu.memory_space<vmem>>, vector<256x128xf32>,
    %c1_i32 = arith.constant 1 : i32
    %16 = arith.cmpi eq, %arg1, %c1_i32 : i32
    %17 = arith.extui %16 : i1 to i32
    %c0_i32_14 = arith.constant 0 : i32
    %18 = arith.cmpi ne, %17, %c0_i32_14 : i32
    scf.if %18 {
      %c0_15 = arith.constant 0 : index
      %c0_16 = arith.constant 0 : index
      %19 = vector.load %arg10[%c0_15, %c0_16] : memref<256x128xf32, #tpu.memory_space<vmem>>, vector<256x128xf32>
      %c0_17 = arith.constant 0 : index
      %c0_18 = arith.constant 0 : index
      %20 = vector.load %arg6[%c0_17, %c0_18] : memref<1x128xf32, #tpu.memory_space<vmem>>, vector<1x128xf32>
      %21 = vector.broadcast %20 : vector<1x128xf32> to vector<256x128xf32>
      %22 = arith.addf %19, %21 : vector<256x128xf32>
      %cst_19 = arith.constant 0.000000e+00 : f32
      %23 = vector.broadcast %cst_19 : f32 to vector<256x128xf32>
      %24 = arith.maximumf %22, %23 : vector<256x128xf32>
      %25 = arith.addf %24, %3 : vector<256x128xf32>
      %cst_20 = arith.constant dense<0.000000e+00> : vector<256xf32>
      %26 = vector.multi_reduction <add>, %25, %cst_20 [1] : vector<256x128xf32> to vector<256xf32>
      %27 = vector.shape_cast %26 : vector<256xf32> to vector<256x1xf32>
      %cst_21 = arith.constant 1.280000e+02 : f32
      %28 = vector.broadcast %cst_21 : f32 to vector<256x1xf32>
      %29 = arith.divf %27, %28 : vector<256x1xf32>
      %30 = vector.broadcast %29 : vector<256x1xf32> to vector<256x128xf32>
      %31 = arith.subf %25, %30 : vector<256x128xf32>
      %32 = arith.mulf %31, %31 : vector<256x128xf32>
      %cst_22 = arith.constant dense<0.000000e+00> : vector<256xf32>
      %33 = vector.multi_reduction <add>, %32, %cst_22 [1] : vector<256x128xf32> to vector<256xf32>
      %34 = vector.shape_cast %33 : vector<256xf32> to vector<256x1xf32>
      %cst_23 = arith.constant 1.280000e+02 : f32
      %35 = vector.broadcast %cst_23 : f32 to vector<256x1xf32>
      %36 = arith.divf %34, %35 : vector<256x1xf32>
      %37 = vector.broadcast %29 : vector<256x1xf32> to vector<256x128xf32>
      %38 = arith.subf %25, %37 : vector<256x128xf32>
      %cst_24 = arith.constant 9.99999997E-7 : f32
      %39 = vector.broadcast %cst_24 : f32 to vector<256x1xf32>
      %40 = arith.addf %36, %39 : vector<256x1xf32>
      %41 = math.rsqrt %40 : vector<256x1xf32>
      %42 = vector.broadcast %41 : vector<256x1xf32> to vector<256x128xf32>
      %43 = arith.mulf %38, %42 : vector<256x128xf32>
      %c0_25 = arith.constant 0 : index
      %c0_26 = arith.constant 0 : index
      %44 = vector.load %arg7[%c0_25, %c0_26] : memref<1x128xf32, #tpu.memory_space<vmem>>, vector<1x128xf32>
      %45 = vector.broadcast %44 : vector<1x128xf32> to vector<256x128xf32>
      %46 = arith.mulf %43, %45 : vector<256x128xf32>
      %c0_27 = arith.constant 0 : index
      %c0_28 = arith.constant 0 : index
      %47 = vector.load %arg8[%c0_27, %c0_28] : memref<1x128xf32, #tpu.memory_space<vmem>>, vector<1x128xf32>
      %48 = vector.broadcast %47 : vector<1x128xf32> to vector<256x128xf32>
      %49 = arith.addf %46, %48 : vector<256x128xf32>
      %c0_29 = arith.constant 0 : index
      %c0_30 = arith.constant 0 : index
      %50 = vector.load %arg9[%c0_29, %c0_30] : memref<256x128xf32, #tpu.memory_space<vmem>>, vector<256x128xf32>
      tpu.vector_store %arg9[%c0_29, %c0_30], %49 {strides = array<i32>} : memref<256x128xf32, #tpu.memory_space<vmem>>, vector<256x128xf32>,
    } else {
    }
    return
  }
  func.func @transform_0(%arg0: i32, %arg1: i32) -> (i32, i32) {
    %c0_i32 = arith.constant 0 : i32
    %c0_i32_0 = arith.constant 0 : i32
    return %arg0, %c0_i32 : i32, i32
  }
  func.func @transform_1(%arg0: i32, %arg1: i32) -> (i32, i32) {
    %c0_i32 = arith.constant 0 : i32
    %c0_i32_0 = arith.constant 0 : i32
    return %c0_i32, %arg1 : i32, i32
  }
  func.func @transform_2(%arg0: i32, %arg1: i32) -> (i32, i32) {
    %c0_i32 = arith.constant 0 : i32
    %c0_i32_0 = arith.constant 0 : i32
    return %c0_i32, %arg1 : i32, i32
  }
  func.func @transform_3(%arg0: i32, %arg1: i32) -> (i32, i32) {
    %c0_i32 = arith.constant 0 : i32
    %c0_i32_0 = arith.constant 0 : i32
    return %arg1, %c0_i32 : i32, i32
  }
  func.func @transform_4(%arg0: i32, %arg1: i32) -> (i32, i32) {
    %c0_i32 = arith.constant 0 : i32
    %c0_i32_0 = arith.constant 0 : i32
    %c0_i32_1 = arith.constant 0 : i32
    return %c0_i32, %c0_i32_0 : i32, i32
  }
  func.func @transform_5(%arg0: i32, %arg1: i32) -> (i32, i32) {
    %c0_i32 = arith.constant 0 : i32
    %c0_i32_0 = arith.constant 0 : i32
    %c0_i32_1 = arith.constant 0 : i32
    return %c0_i32, %c0_i32_0 : i32, i32
  }
  func.func @transform_6(%arg0: i32, %arg1: i32) -> (i32, i32) {
    %c0_i32 = arith.constant 0 : i32
    %c0_i32_0 = arith.constant 0 : i32
    %c0_i32_1 = arith.constant 0 : i32
    return %c0_i32, %c0_i32_0 : i32, i32
  }
  func.func @transform_7(%arg0: i32, %arg1: i32) -> (i32, i32) {
    %c0_i32 = arith.constant 0 : i32
    %c0_i32_0 = arith.constant 0 : i32
    return %arg0, %c0_i32 : i32, i32
  }
}

</mosaic_0001>

<llo_original>
// kernel: tpu_custom_call.1
$region0: #{tpu_custom_call.1}
  #allocation0 [shape = 'u32[]', space=smem, size = 0x4, offset = 0x4, fixed_abs, tag = 'smem constant byte address 0x4 - core index']
  #allocation1 [shape = 'u32[72,128]{1,0:T(1,128)}', space=vmem, size = 0x9000, scoped, tag = 'internal scratch']
  #allocation2 [shape = 'f32[256,128]{1,0:T(8,128)}', space=vmem, size = 0x20000, scoped, tag = 'scratch operand']
  %s0 = inlined_call_operand.hbm [shape: f32[512,128], index: 0, kind: input, shape index: {}]
  %s1 = inlined_call_operand.hbm [shape: f32[128,512], index: 1, kind: input, shape index: {}]
  %s2 = inlined_call_operand.hbm [shape: f32[1,512], index: 2, kind: input, shape index: {}]
  %s3 = inlined_call_operand.hbm [shape: f32[512,128], index: 3, kind: input, shape index: {}]
  %s4 = inlined_call_operand.vmem [shape: f32[1,128], index: 4, kind: input, shape index: {}]
  %s5 = inlined_call_operand.vmem [shape: f32[1,128], index: 5, kind: input, shape index: {}]
  %s6 = inlined_call_operand.vmem [shape: f32[1,128], index: 6, kind: input, shape index: {}]
  %s7 = inlined_call_operand.hbm [shape: f32[512,128], index: 7, kind: output, shape index: {}]
  %s8 = sld [smem:[#allocation0]]
  $region85: #{tpu_custom_call.1} parent=0
    _
  %s10 = ssub.s32 1, %s8
  %s11 = scalar_select 0, %s10, %s8
  $region1: #{tpu_custom_call.1} parent=0
    #allocation3 [shape = 'u8[262144]{0}', space=vmem, size = 0x40000, scoped, tag = 'input window, operand 0']
    #allocation4 [shape = 's32[2]{0}', space=sflag, size = 0x8, scoped, tag = 'scoped memory for tpu_custom_call.1']
    #allocation5 [shape = 's32[2]{0}', space=sflag, size = 0x8, scoped, tag = 'scoped memory for tpu_custom_call.1']
    #allocation6 [shape = 'u8[262144]{0}', space=vmem, size = 0x40000, scoped, tag = 'input window, operand 1']
    #allocation7 [shape = 's32[2]{0}', space=sflag, size = 0x8, scoped, tag = 'scoped memory for tpu_custom_call.1']
    #allocation8 [shape = 'u8[2048]{0}', space=vmem, size = 0x800, scoped, tag = 'input window, operand 2']
    #allocation9 [shape = 'u8[262144]{0}', space=vmem, size = 0x40000, scoped, tag = 'input window, operand 3']
    #allocation10 [shape = 's32[2]{0}', space=sflag, size = 0x8, scoped, tag = 'scoped memory for tpu_custom_call.1']
    #allocation11 [shape = 'u8[262144]{0}', space=vmem, size = 0x40000, scoped, tag = 'output window, operand 0']
    %12 = vsyncpa [#allocation4], 0
    %s13 = scalar_lea.sflag [#allocation4], 1
    %14 = vsyncpa %s13, 0
    %15 = vsyncpa [#allocation7], 0
    %s16 = scalar_lea.sflag [#allocation7], 1
    %17 = vsyncpa %s16, 0
    %18 = vsyncpa [#allocation10], 0
    %s19 = scalar_lea.sflag [#allocation10], 1
    %20 = vsyncpa %s19, 0
    %21 = vsyncpa [#allocation5], 0
    %s22 = scalar_lea.sflag [#allocation5], 1
    %23 = vsyncpa %s22, 0
    loop: start=0, step=1, limit=6
    $region2: #{tpu_custom_call.1} parent=1 // loop_pre_header
      _
    $region3: #{tpu_custom_call.1} parent=1 // loop_header
      %s25 = sphi 0, %s29
      %p26 = scmp.ge.s32.totalorder %s25, 6
      %s32 = sphi 0, %s44
      %s33 = sphi 0, %s40
      %s34 = sphi 0, %s32
      %s35 = sphi 0, %s33
      %s36 = sphi 0, %s34
      %s37 = sphi 0, %s35
      %s47 = sphi 0, %s49
      %s50 = sphi 0, %s47
      %s51 = sphi 0, %s50
      %s67 = sphi 0, %s51
      %s73 = sphi 0, %s75
      %s76 = sphi 0, %s73
      %s77 = sphi 0, %s76
      %s93 = sphi 0, %s77
      %s99 = sphi 0, %s101
      %s102 = sphi 0, %s99
      %s103 = sphi 0, %s102
      %s119 = sphi 0, %s103
      %s125 = sphi 0, %s127
      %s128 = sphi 0, %s125
      %s129 = sphi 0, %s128
      %s145 = sphi 0, %s129
      %s149 = sphi 0, %s149
      %s151 = sphi 0, %s149
      %s152 = sphi 0, %s151
      %s166 = sphi 0, %s152
      %s170 = sphi 0, %s170
      %s172 = sphi 0, %s170
      %s173 = sphi 0, %s172
      %s187 = sphi 0, %s173
      %s191 = sphi 0, %s191
      %s193 = sphi 0, %s191
      %s194 = sphi 0, %s193
      %s208 = sphi 0, %s194
      %s214 = sphi 0, %s216
      %s217 = sphi 0, %s214
      %s218 = sphi 0, %s217
      %s234 = sphi 0, %s218
    $region4: #{tpu_custom_call.1} parent=1 // loop_header_branch
      %28 = sbr.rel (%p26) target = $region8
    $region5: #{tpu_custom_call.1} parent=1 // loop_body
      %s30 = ssub.s32 %s25, 1
      %s31 = ssub.s32 %s25, 2
      %s38 = sadd.s32 1, %s33
      %p39 = scmp.ge.s32.totalorder %s38, 2
      %s40 = scalar_select %p39, 0, %s38
      %s41 = sadd.s32 1, %s32
      %s42 = scalar_select %p39, %s41, %s32
      %p43 = scmp.ge.s32.totalorder %s42, 2
      %s44 = scalar_select %p43, 0, %s42
      %s45 = ssub.s32 %s32, %s44
      %p46 = scmp.eq.s32.totalorder %s45, 0
      %s48 = sadd.s32 %s47, 1
      %s49 = scalar_select %p46, %s47, %s48
      %p52 = pneg %p46
      %p53 = scmp.eq.s32.totalorder %s25, 3
      %p54 = por %p52, %p53
      %p55 = scmp.ne.s32.totalorder %s47, %s50
      %p56 = scmp.eq.s32.totalorder %s25, 0
      %p57 = por %p55, %p56
      %p58 = scmp.ne.s32.totalorder %s47, %s50
      %p59 = scmp.eq.s32.totalorder %s30, 3
      %p60 = por %p58, %p59
      %p61 = scmp.ne.s32.totalorder %s50, %s51
      %p62 = scmp.eq.s32.totalorder %s30, 0
      %p63 = por %p61, %p62
      %p64 = scmp.ne.s32.totalorder %s50, %s51
      %p65 = scmp.eq.s32.totalorder %s31, 3
      %p66 = por %p64, %p65
      %p68 = scmp.ne.s32.totalorder %s51, %s67
      %p69 = scmp.eq.s32.totalorder %s31, 0
      %p70 = por %p68, %p69
      %s71 = ssub.s32 %s33, %s40
      %p72 = scmp.eq.s32.totalorder %s71, 0
      %s74 = sadd.s32 %s73, 1
      %s75 = scalar_select %p72, %s73, %s74
      %p78 = pneg %p72
      %p79 = scmp.eq.s32.totalorder %s25, 3
      %p80 = por %p78, %p79
      %p81 = scmp.ne.s32.totalorder %s73, %s76
      %p82 = scmp.eq.s32.totalorder %s25, 0
      %p83 = por %p81, %p82
      %p84 = scmp.ne.s32.totalorder %s73, %s76
      %p85 = scmp.eq.s32.totalorder %s30, 3
      %p86 = por %p84, %p85
      %p87 = scmp.ne.s32.totalorder %s76, %s77
      %p88 = scmp.eq.s32.totalorder %s30, 0
      %p89 = por %p87, %p88
      %p90 = scmp.ne.s32.totalorder %s76, %s77
      %p91 = scmp.eq.s32.totalorder %s31, 3
      %p92 = por %p90, %p91
      %p94 = scmp.ne.s32.totalorder %s77, %s93
      %p95 = scmp.eq.s32.totalorder %s31, 0
      %p96 = por %p94, %p95
      %s97 = ssub.s32 %s33, %s40
      %p98 = scmp.eq.s32.totalorder %s97, 0
      %s100 = sadd.s32 %s99, 1
      %s101 = scalar_select %p98, %s99, %s100
      %p104 = pneg %p98
      %p105 = scmp.eq.s32.totalorder %s25, 3
      %p106 = por %p104, %p105
      %p107 = scmp.ne.s32.totalorder %s99, %s102
      %p108 = scmp.eq.s32.totalorder %s25, 0
      %p109 = por %p107, %p108
      %p110 = scmp.ne.s32.totalorder %s99, %s102
      %p111 = scmp.eq.s32.totalorder %s30, 3
      %p112 = por %p110, %p111
      %p113 = scmp.ne.s32.totalorder %s102, %s103
      %p114 = scmp.eq.s32.totalorder %s30, 0
      %p115 = por %p113, %p114
      %p116 = scmp.ne.s32.totalorder %s102, %s103
      %p117 = scmp.eq.s32.totalorder %s31, 3
      %p118 = por %p116, %p117
      %p120 = scmp.ne.s32.totalorder %s103, %s119
      %p121 = scmp.eq.s32.totalorder %s31, 0
      %p122 = por %p120, %p121
      %s123 = ssub.s32 %s33, %s40
      %p124 = scmp.eq.s32.totalorder %s123, 0
      %s126 = sadd.s32 %s125, 1
      %s127 = scalar_select %p124, %s125, %s126
      %p130 = pneg %p124
      %p131 = scmp.eq.s32.totalorder %s25, 3
      %p132 = por %p130, %p131
      %p133 = scmp.ne.s32.totalorder %s125, %s128
      %p134 = scmp.eq.s32.totalorder %s25, 0
      %p135 = por %p133, %p134
      %p136 = scmp.ne.s32.totalorder %s125, %s128
      %p137 = scmp.eq.s32.totalorder %s30, 3
      %p138 = por %p136, %p137
      %p139 = scmp.ne.s32.totalorder %s128, %s129
      %p140 = scmp.eq.s32.totalorder %s30, 0
      %p141 = por %p139, %p140
      %p142 = scmp.ne.s32.totalorder %s128, %s129
      %p143 = scmp.eq.s32.totalorder %s31, 3
      %p144 = por %p142, %p143
      %p146 = scmp.ne.s32.totalorder %s129, %s145
      %p147 = scmp.eq.s32.totalorder %s31, 0
      %p148 = por %p146, %p147
      %s150 = sadd.s32 %s149, 1
      %p153 = scmp.eq.s32.totalorder %s25, 3
      %p154 = scmp.ne.s32.totalorder %s149, %s151
      %p155 = scmp.eq.s32.totalorder %s25, 0
      %p156 = por %p154, %p155
      %p157 = scmp.ne.s32.totalorder %s149, %s151
      %p158 = scmp.eq.s32.totalorder %s30, 3
      %p159 = por %p157, %p158
      %p160 = scmp.ne.s32.totalorder %s151, %s152
      %p161 = scmp.eq.s32.totalorder %s30, 0
      %p162 = por %p160, %p161
      %p163 = scmp.ne.s32.totalorder %s151, %s152
      %p164 = scmp.eq.s32.totalorder %s31, 3
      %p165 = por %p163, %p164
      %p167 = scmp.ne.s32.totalorder %s152, %s166
      %p168 = scmp.eq.s32.totalorder %s31, 0
      %p169 = por %p167, %p168
      %s171 = sadd.s32 %s170, 1
      %p174 = scmp.eq.s32.totalorder %s25, 3
      %p175 = scmp.ne.s32.totalorder %s170, %s172
      %p176 = scmp.eq.s32.totalorder %s25, 0
      %p177 = por %p175, %p176
      %p178 = scmp.ne.s32.totalorder %s170, %s172
      %p179 = scmp.eq.s32.totalorder %s30, 3
      %p180 = por %p178, %p179
      %p181 = scmp.ne.s32.totalorder %s172, %s173
      %p182 = scmp.eq.s32.totalorder %s30, 0
      %p183 = por %p181, %p182
      %p184 = scmp.ne.s32.totalorder %s172, %s173
      %p185 = scmp.eq.s32.totalorder %s31, 3
      %p186 = por %p184, %p185
      %p188 = scmp.ne.s32.totalorder %s173, %s187
      %p189 = scmp.eq.s32.totalorder %s31, 0
      %p190 = por %p188, %p189
      %s192 = sadd.s32 %s191, 1
      %p195 = scmp.eq.s32.totalorder %s25, 3
      %p196 = scmp.ne.s32.totalorder %s191, %s193
      %p197 = scmp.eq.s32.totalorder %s25, 0
      %p198 = por %p196, %p197
      %p199 = scmp.ne.s32.totalorder %s191, %s193
      %p200 = scmp.eq.s32.totalorder %s30, 3
      %p201 = por %p199, %p200
      %p202 = scmp.ne.s32.totalorder %s193, %s194
      %p203 = scmp.eq.s32.totalorder %s30, 0
      %p204 = por %p202, %p203
      %p205 = scmp.ne.s32.totalorder %s193, %s194
      %p206 = scmp.eq.s32.totalorder %s31, 3
      %p207 = por %p205, %p206
      %p209 = scmp.ne.s32.totalorder %s194, %s208
      %p210 = scmp.eq.s32.totalorder %s31, 0
      %p211 = por %p209, %p210
      %s212 = ssub.s32 %s32, %s44
      %p213 = scmp.eq.s32.totalorder %s212, 0
      %s215 = sadd.s32 %s214, 1
      %s216 = scalar_select %p213, %s214, %s215
      %p219 = pneg %p213
      %p220 = scmp.eq.s32.totalorder %s25, 3
      %p221 = por %p219, %p220
      %p222 = scmp.ne.s32.totalorder %s214, %s217
      %p223 = scmp.eq.s32.totalorder %s25, 0
      %p224 = por %p222, %p223
      %p225 = scmp.ne.s32.totalorder %s214, %s217
      %p226 = scmp.eq.s32.totalorder %s30, 3
      %p227 = por %p225, %p226
      %p228 = scmp.ne.s32.totalorder %s217, %s218
      %p229 = scmp.eq.s32.totalorder %s30, 0
      %p230 = por %p228, %p229
      %p231 = scmp.ne.s32.totalorder %s217, %s218
      %p232 = scmp.eq.s32.totalorder %s31, 3
      %p233 = por %p231, %p232
      %p235 = scmp.ne.s32.totalorder %s218, %s234
      %p236 = scmp.eq.s32.totalorder %s31, 0
      %p237 = por %p235, %p236
      %p238 = scmp.le.s32.totalorder 1, %s25
      %p239 = scmp.lt.s32.totalorder %s25, 5
      %p240 = pnand %p238, %p239
      %p241 = pneg %p240
      // Predicated region
      $region9: #{tpu_custom_call.1} parent=5 // pred_check
        _
      $region10: #{tpu_custom_call.1} parent=5 // pred_check_branch
        %243 = sbr.rel (%p240) target = $region12
      $region11: #{tpu_custom_call.1} parent=5 // pred_region
        %s244 = ssub.s32 %s25, 1
        // Predicated region
        $region13: #{tpu_custom_call.1} parent=11 // pred_check
          %p245 = pneg %p162
        $region14: #{tpu_custom_call.1} parent=11 // pred_check_branch
          %247 = sbr.rel (%p245) target = $region16
        $region15: #{tpu_custom_call.1} parent=11 // pred_region
          _
        $region16: #{tpu_custom_call.1} parent=11 // pred_fallthru
          _
        // Predicated region
        $region17: #{tpu_custom_call.1} parent=11 // pred_check
          %p248 = pneg %p183
        $region18: #{tpu_custom_call.1} parent=11 // pred_check_branch
          %250 = sbr.rel (%p248) target = $region20
        $region19: #{tpu_custom_call.1} parent=11 // pred_region
          _
        $region20: #{tpu_custom_call.1} parent=11 // pred_fallthru
          _
        // Predicated region
        $region21: #{tpu_custom_call.1} parent=11 // pred_check
          %p251 = pneg %p204
        $region22: #{tpu_custom_call.1} parent=11 // pred_check_branch
          %253 = sbr.rel (%p251) target = $region24
        $region23: #{tpu_custom_call.1} parent=11 // pred_region
          _
        $region24: #{tpu_custom_call.1} parent=11 // pred_fallthru
          _
      $region12: #{tpu_custom_call.1} parent=5 // pred_fallthru
        _
      %p254 = scmp.lt.s32.totalorder %s25, 4
      // Predicated region
      $region25: #{tpu_custom_call.1} parent=5 // pred_check
        %p255 = pneg %p254
      $region26: #{tpu_custom_call.1} parent=5 // pred_check_branch
        %257 = sbr.rel (%p255) target = $region28
      $region27: #{tpu_custom_call.1} parent=5 // pred_region
        // Predicated region
        $region29: #{tpu_custom_call.1} parent=27 // pred_check
          %p258 = pneg %p57
        $region30: #{tpu_custom_call.1} parent=27 // pred_check_branch
          %260 = sbr.rel (%p258) target = $region32
        $region31: #{tpu_custom_call.1} parent=27 // pred_region
          %s261 = sand.u32 %s47, 1
          %s262 = scalar_lea.sflag [#allocation4], %s261
          %s263 = sand.u32 %s47, 1
          %s264 = smul.addr %s263, 256
          %s265 = scalar_lea.vmem [#allocation3], %s264
          %s266 = smul.u32 32, %s32
          %268 = vsyncadd %s262, 0
          %s269 = smul.addr %s266, 8
          %s270 = scalar_lea.hbm %s0, %s269
          %s271 = sshll.u32 %s270, 4
          %s272 = int_to_ptr.hbm [resolvable:$true] %s271
          %s273 = sshll.u32 %s265, 4
          %s274 = int_to_ptr.vmem [resolvable:$true] %s273
          %279 = dma.hbm_to_vmem [thread:$0]  %s272, 4096, %s274, %s262, 128, 128, 8
        $region32: #{tpu_custom_call.1} parent=27 // pred_fallthru
          _
        // Predicated region
        $region33: #{tpu_custom_call.1} parent=27 // pred_check
          %p280 = pneg %p83
        $region34: #{tpu_custom_call.1} parent=27 // pred_check_branch
          %282 = sbr.rel (%p280) target = $region36
        $region35: #{tpu_custom_call.1} parent=27 // pred_region
          %s283 = sand.u32 %s25, 1
          %s284 = scalar_lea.sflag [#allocation7], %s283
          %s285 = sand.u32 %s73, 1
          %s286 = smul.addr %s285, 256
          %s287 = scalar_lea.vmem [#allocation6], %s286
          %s288 = smul.u32 2, %s33
          %290 = vsyncadd %s284, 0
          %s291 = smul.addr %s288, 8
          %s292 = scalar_lea.hbm %s1, %s291
          %s293 = sshll.u32 %s292, 4
          %s294 = int_to_ptr.hbm [resolvable:$true] %s293
          %s295 = sshll.u32 %s287, 4
          %s296 = int_to_ptr.vmem [resolvable:$true] %s295
          %301 = dma.hbm_to_vmem [thread:$0]  %s294, 4096, %s296, %s284, 512, 256, 16
        $region36: #{tpu_custom_call.1} parent=27 // pred_fallthru
          _
        // Predicated region
        $region37: #{tpu_custom_call.1} parent=27 // pred_check
          %p302 = pneg %p109
        $region38: #{tpu_custom_call.1} parent=27 // pred_check_branch
          %304 = sbr.rel (%p302) target = $region40
        $region39: #{tpu_custom_call.1} parent=27 // pred_region
          %s305 = sand.u32 %s25, 1
          %s306 = scalar_lea.sflag [#allocation7], %s305
          %s307 = sand.u32 %s99, 1
          %s308 = smul.addr %s307, 2
          %s309 = scalar_lea.vmem [#allocation8], %s308
          %s310 = smul.u32 2, %s33
          %312 = vsyncadd %s306, 0
          %s313 = scalar_lea.hbm %s2, %s310
          %s315 = sshll.u32 %s313, 4
          %s316 = int_to_ptr.hbm [resolvable:$true] %s315
          %s317 = sshll.u32 %s309, 4
          %s318 = int_to_ptr.vmem [resolvable:$true] %s317
          %320 = dma.hbm_to_vmem [thread:$0]  %s316, 32, %s318, %s306
        $region40: #{tpu_custom_call.1} parent=27 // pred_fallthru
          _
        // Predicated region
        $region41: #{tpu_custom_call.1} parent=27 // pred_check
          %p321 = pneg %p135
        $region42: #{tpu_custom_call.1} parent=27 // pred_check_branch
          %323 = sbr.rel (%p321) target = $region44
        $region43: #{tpu_custom_call.1} parent=27 // pred_region
          %s324 = sand.u32 %s125, 1
          %s325 = scalar_lea.sflag [#allocation10], %s324
          %s326 = sand.u32 %s125, 1
          %s327 = smul.addr %s326, 256
          %s328 = scalar_lea.vmem [#allocation9], %s327
          %s329 = smul.u32 32, %s33
          %331 = vsyncadd %s325, 0
          %s332 = smul.addr %s329, 8
          %s333 = scalar_lea.hbm %s3, %s332
          %s334 = sshll.u32 %s333, 4
          %s335 = int_to_ptr.hbm [resolvable:$true] %s334
          %s336 = sshll.u32 %s328, 4
          %s337 = int_to_ptr.vmem [resolvable:$true] %s336
          %342 = dma.hbm_to_vmem [thread:$0]  %s335, 4096, %s337, %s325, 128, 128, 8
        $region44: #{tpu_custom_call.1} parent=27 // pred_fallthru
          _
      $region28: #{tpu_custom_call.1} parent=5 // pred_fallthru
        _
      %p343 = scmp.le.s32.totalorder 1, %s25
      %p344 = scmp.lt.s32.totalorder %s25, 5
      %p345 = pnand %p343, %p344
      %p346 = pneg %p345
      // Predicated region
      $region45: #{tpu_custom_call.1} parent=5 // pred_check
        _
      $region46: #{tpu_custom_call.1} parent=5 // pred_check_branch
        %348 = sbr.rel (%p345) target = $region48
      $region47: #{tpu_custom_call.1} parent=5 // pred_region
        %s349 = ssub.s32 %s25, 1
        %s350 = sand.u32 %s50, 1
        %s351 = scalar_lea.sflag [#allocation4], %s350
        %s352 = sand.u32 %s50, 1
        %s353 = smul.addr %s352, 256
        %s354 = scalar_lea.vmem [#allocation3], %s353
        // Predicated region
        $region49: #{tpu_custom_call.1} parent=47 // pred_check
          %p355 = pneg %p63
        $region50: #{tpu_custom_call.1} parent=47 // pred_check_branch
          %357 = sbr.rel (%p355) target = $region52
        $region51: #{tpu_custom_call.1} parent=47 // pred_region
          %359 = dma.done %s351, 4096
        $region52: #{tpu_custom_call.1} parent=47 // pred_fallthru
          _
        %s360 = sand.u32 %s30, 1
        %s361 = scalar_lea.sflag [#allocation7], %s360
        %s362 = sand.u32 %s76, 1
        %s363 = smul.addr %s362, 256
        %s364 = scalar_lea.vmem [#allocation6], %s363
        // Predicated region
        $region53: #{tpu_custom_call.1} parent=47 // pred_check
          %p365 = pneg %p89
        $region54: #{tpu_custom_call.1} parent=47 // pred_check_branch
          %367 = sbr.rel (%p365) target = $region56
        $region55: #{tpu_custom_call.1} parent=47 // pred_region
          %369 = dma.done %s361, 4096
        $region56: #{tpu_custom_call.1} parent=47 // pred_fallthru
          _
        %s370 = sand.u32 %s30, 1
        %s371 = scalar_lea.sflag [#allocation7], %s370
        %s372 = sand.u32 %s102, 1
        %s373 = smul.addr %s372, 2
        %s374 = scalar_lea.vmem [#allocation8], %s373
        // Predicated region
        $region57: #{tpu_custom_call.1} parent=47 // pred_check
          %p375 = pneg %p115
        $region58: #{tpu_custom_call.1} parent=47 // pred_check_branch
          %377 = sbr.rel (%p375) target = $region60
        $region59: #{tpu_custom_call.1} parent=47 // pred_region
          %379 = dma.done %s371, 32
        $region60: #{tpu_custom_call.1} parent=47 // pred_fallthru
          _
        %s380 = sand.u32 %s128, 1
        %s381 = scalar_lea.sflag [#allocation10], %s380
        %s382 = sand.u32 %s128, 1
        %s383 = smul.addr %s382, 256
        %s384 = scalar_lea.vmem [#allocation9], %s383
        // Predicated region
        $region61: #{tpu_custom_call.1} parent=47 // pred_check
          %p385 = pneg %p141
        $region62: #{tpu_custom_call.1} parent=47 // pred_check_branch
          %387 = sbr.rel (%p385) target = $region64
        $region63: #{tpu_custom_call.1} parent=47 // pred_region
          %389 = dma.done %s381, 4096
        $region64: #{tpu_custom_call.1} parent=47 // pred_fallthru
          _
        %s390 = sand.u32 %s50, 1
        %s391 = scalar_lea.sflag [#allocation4], %s390
        %s392 = sand.u32 %s50, 1
        %s393 = smul.addr %s392, 256
        %s394 = scalar_lea.vmem [#allocation3], %s393
        %p395 = pneg %p63
        %p396 = pneg %p60
        %s397 = sand.u32 %s30, 1
        %s398 = scalar_lea.sflag [#allocation7], %s397
        %s399 = sand.u32 %s76, 1
        %s400 = smul.addr %s399, 256
        %s401 = scalar_lea.vmem [#allocation6], %s400
        %p402 = pneg %p89
        %p403 = pneg %p86
        %s404 = sand.u32 %s30, 1
        %s405 = scalar_lea.sflag [#allocation7], %s404
        %s406 = sand.u32 %s102, 1
        %s407 = smul.addr %s406, 2
        %s408 = scalar_lea.vmem [#allocation8], %s407
        %p409 = pneg %p115
        %p410 = pneg %p112
        %s411 = sand.u32 %s128, 1
        %s412 = scalar_lea.sflag [#allocation10], %s411
        %s413 = sand.u32 %s128, 1
        %s414 = smul.addr %s413, 256
        %s415 = scalar_lea.vmem [#allocation9], %s414
        %p416 = pneg %p141
        %p417 = pneg %p138
        %p418 = pneg %p162
        %p419 = pneg %p159
        %p420 = pneg %p183
        %p421 = pneg %p180
        %p422 = pneg %p204
        %p423 = pneg %p201
        %p424 = pneg %p230
        %p425 = pneg %p227
        %s426 = sand.u32 %s217, 1
        %s427 = scalar_lea.sflag [#allocation5], %s426
        %s428 = sand.u32 %s217, 1
        %s429 = smul.addr %s428, 256
        %s430 = scalar_lea.vmem [#allocation11], %s429
        %s431 = smul.u32 32, %s34
        %s432 = smul.u32 2, %s35
        %s433 = smul.u32 2, %s35
        %s434 = smul.u32 32, %s35
        %s435 = smul.u32 32, %s34
        %p436 = scmp.eq.s32.totalorder %s35, 0
        // Predicated region
        $region65: #{tpu_custom_call.1} parent=47 // pred_check
          %p437 = pneg %p436
        $region66: #{tpu_custom_call.1} parent=47 // pred_check_branch
          %439 = sbr.rel (%p437) target = $region68
        $region67: #{tpu_custom_call.1} parent=47 // pred_region
          %440 = vst [vmem:[#allocation2] sm:$0xff] 0.0
          %441 = vst [vmem:[#allocation2 + $0x8] sm:$0xff] 0.0
          %442 = vst [vmem:[#allocation2 + $0x10] sm:$0xff] 0.0
          %443 = vst [vmem:[#allocation2 + $0x18] sm:$0xff] 0.0
          %444 = vst [vmem:[#allocation2 + $0x20] sm:$0xff] 0.0
          %445 = vst [vmem:[#allocation2 + $0x28] sm:$0xff] 0.0
          %446 = vst [vmem:[#allocation2 + $0x30] sm:$0xff] 0.0
          %447 = vst [vmem:[#allocation2 + $0x38] sm:$0xff] 0.0
          %448 = vst [vmem:[#allocation2 + $0x40] sm:$0xff] 0.0
          %449 = vst [vmem:[#allocation2 + $0x48] sm:$0xff] 0.0
          %450 = vst [vmem:[#allocation2 + $0x50] sm:$0xff] 0.0
          %451 = vst [vmem:[#allocation2 + $0x58] sm:$0xff] 0.0
          %452 = vst [vmem:[#allocation2 + $0x60] sm:$0xff] 0.0
          %453 = vst [vmem:[#allocation2 + $0x68] sm:$0xff] 0.0
          %454 = vst [vmem:[#allocation2 + $0x70] sm:$0xff] 0.0
          %455 = vst [vmem:[#allocation2 + $0x78] sm:$0xff] 0.0
          %456 = vst [vmem:[#allocation2 + $0x80] sm:$0xff] 0.0
          %457 = vst [vmem:[#allocation2 + $0x88] sm:$0xff] 0.0
          %458 = vst [vmem:[#allocation2 + $0x90] sm:$0xff] 0.0
          %459 = vst [vmem:[#allocation2 + $0x98] sm:$0xff] 0.0
          %460 = vst [vmem:[#allocation2 + $0xa0] sm:$0xff] 0.0
          %461 = vst [vmem:[#allocation2 + $0xa8] sm:$0xff] 0.0
          %462 = vst [vmem:[#allocation2 + $0xb0] sm:$0xff] 0.0
          %463 = vst [vmem:[#allocation2 + $0xb8] sm:$0xff] 0.0
          %464 = vst [vmem:[#allocation2 + $0xc0] sm:$0xff] 0.0
          %465 = vst [vmem:[#allocation2 + $0xc8] sm:$0xff] 0.0
          %466 = vst [vmem:[#allocation2 + $0xd0] sm:$0xff] 0.0
          %467 = vst [vmem:[#allocation2 + $0xd8] sm:$0xff] 0.0
          %468 = vst [vmem:[#allocation2 + $0xe0] sm:$0xff] 0.0
          %469 = vst [vmem:[#allocation2 + $0xe8] sm:$0xff] 0.0
          %470 = vst [vmem:[#allocation2 + $0xf0] sm:$0xff] 0.0
          %471 = vst [vmem:[#allocation2 + $0xf8] sm:$0xff] 0.0
        $region68: #{tpu_custom_call.1} parent=47 // pred_fallthru
          _
        %v472 = vld [vmem:[%s354] sm:$0xff]
        %v473 = vld [vmem:[%s354 + $0x8] sm:$0xff]
        %v474 = vld [vmem:[%s354 + $0x10] sm:$0xff]
        %v475 = vld [vmem:[%s354 + $0x18] sm:$0xff]
        %v476 = vld [vmem:[%s354 + $0x20] sm:$0xff]
        %v477 = vld [vmem:[%s354 + $0x28] sm:$0xff]
        %v478 = vld [vmem:[%s354 + $0x30] sm:$0xff]
        %v479 = vld [vmem:[%s354 + $0x38] sm:$0xff]
        %v480 = vld [vmem:[%s354 + $0x40] sm:$0xff]
        %v481 = vld [vmem:[%s354 + $0x48] sm:$0xff]
        %v482 = vld [vmem:[%s354 + $0x50] sm:$0xff]
        %v483 = vld [vmem:[%s354 + $0x58] sm:$0xff]
        %v484 = vld [vmem:[%s354 + $0x60] sm:$0xff]
        %v485 = vld [vmem:[%s354 + $0x68] sm:$0xff]
        %v486 = vld [vmem:[%s354 + $0x70] sm:$0xff]
        %v487 = vld [vmem:[%s354 + $0x78] sm:$0xff]
        %v488 = vld [vmem:[%s354 + $0x80] sm:$0xff]
        %v489 = vld [vmem:[%s354 + $0x88] sm:$0xff]
        %v490 = vld [vmem:[%s354 + $0x90] sm:$0xff]
        %v491 = vld [vmem:[%s354 + $0x98] sm:$0xff]
        %v492 = vld [vmem:[%s354 + $0xa0] sm:$0xff]
        %v493 = vld [vmem:[%s354 + $0xa8] sm:$0xff]
        %v494 = vld [vmem:[%s354 + $0xb0] sm:$0xff]
        %v495 = vld [vmem:[%s354 + $0xb8] sm:$0xff]
        %v496 = vld [vmem:[%s354 + $0xc0] sm:$0xff]
        %v497 = vld [vmem:[%s354 + $0xc8] sm:$0xff]
        %v498 = vld [vmem:[%s354 + $0xd0] sm:$0xff]
        %v499 = vld [vmem:[%s354 + $0xd8] sm:$0xff]
        %v500 = vld [vmem:[%s354 + $0xe0] sm:$0xff]
        %v501 = vld [vmem:[%s354 + $0xe8] sm:$0xff]
        %v502 = vld [vmem:[%s354 + $0xf0] sm:$0xff]
        %v503 = vld [vmem:[%s354 + $0xf8] sm:$0xff]
        %v504 = vld [vmem:[%s364] sm:$0xff]
        %v505 = vld [vmem:[%s364 + $0x8] sm:$0xff]
        %v506 = vld [vmem:[%s364 + $0x10] sm:$0xff]
        %v507 = vld [vmem:[%s364 + $0x18] sm:$0xff]
        %v508 = vld [vmem:[%s364 + $0x20] sm:$0xff]
        %v509 = vld [vmem:[%s364 + $0x28] sm:$0xff]
        %v510 = vld [vmem:[%s364 + $0x30] sm:$0xff]
        %v511 = vld [vmem:[%s364 + $0x38] sm:$0xff]
        %v512 = vld [vmem:[%s364 + $0x40] sm:$0xff]
        %v513 = vld [vmem:[%s364 + $0x48] sm:$0xff]
        %v514 = vld [vmem:[%s364 + $0x50] sm:$0xff]
        %v515 = vld [vmem:[%s364 + $0x58] sm:$0xff]
        %v516 = vld [vmem:[%s364 + $0x60] sm:$0xff]
        %v517 = vld [vmem:[%s364 + $0x68] sm:$0xff]
        %v518 = vld [vmem:[%s364 + $0x70] sm:$0xff]
        %v519 = vld [vmem:[%s364 + $0x78] sm:$0xff]
        %v520 = vld [vmem:[%s364 + $0x80] sm:$0xff]
        %v521 = vld [vmem:[%s364 + $0x88] sm:$0xff]
        %v522 = vld [vmem:[%s364 + $0x90] sm:$0xff]
        %v523 = vld [vmem:[%s364 + $0x98] sm:$0xff]
        %v524 = vld [vmem:[%s364 + $0xa0] sm:$0xff]
        %v525 = vld [vmem:[%s364 + $0xa8] sm:$0xff]
        %v526 = vld [vmem:[%s364 + $0xb0] sm:$0xff]
        %v527 = vld [vmem:[%s364 + $0xb8] sm:$0xff]
        %v528 = vld [vmem:[%s364 + $0xc0] sm:$0xff]
        %v529 = vld [vmem:[%s364 + $0xc8] sm:$0xff]
        %v530 = vld [vmem:[%s364 + $0xd0] sm:$0xff]
        %v531 = vld [vmem:[%s364 + $0xd8] sm:$0xff]
        %v532 = vld [vmem:[%s364 + $0xe0] sm:$0xff]
        %v533 = vld [vmem:[%s364 + $0xe8] sm:$0xff]
        %v534 = vld [vmem:[%s364 + $0xf0] sm:$0xff]
        %v535 = vld [vmem:[%s364 + $0xf8] sm:$0xff]
        %v536 = vld [vmem:[%s374] sm:$0x3]
        %v538 = vperm.slane %v536, 0
        %v539 = vperm.slane %v536, 1
        %542 = vmatpush.msra.mxu0 %v534
        %543 = vmatpush.msra.mxu0 %v532
        %544 = vmatpush.msra.mxu0 %v530
        %545 = vmatpush.msra.mxu0 %v528
        %546 = vmatpush.msra.mxu0 %v526
        %547 = vmatpush.msra.mxu0 %v524
        %548 = vmatpush.msra.mxu0 %v522
        %549 = vmatpush.msra.mxu0 %v520
        %550 = vmatpush.msra.mxu0 %v518
        %551 = vmatpush.msra.mxu0 %v516
        %552 = vmatpush.msra.mxu0 %v514
        %553 = vmatpush.msra.mxu0 %v512
        %554 = vmatpush.msra.mxu0 %v510
        %555 = vmatpush.msra.mxu0 %v508
        %556 = vmatpush.msra.mxu0 %v506
        %557 = vmatpush.msra.mxu0 %v504
        %558 = vmatmul.f32.gmra.mxu0 %v472
        %v559 = vpop.f32.mrf.mxu0
        %v560 = vadd.f32 %v538, %v559
        %561 = vmatmul.f32.gmra.mxu0 %v473
        %v562 = vpop.f32.mrf.mxu0
        %v563 = vadd.f32 %v538, %v562
        %564 = vmatmul.f32.gmra.mxu0 %v474
        %v565 = vpop.f32.mrf.mxu0
        %v566 = vadd.f32 %v538, %v565
        %567 = vmatmul.f32.gmra.mxu0 %v475
        %v568 = vpop.f32.mrf.mxu0
        %v569 = vadd.f32 %v538, %v568
        %570 = vmatmul.f32.gmra.mxu0 %v476
        %v571 = vpop.f32.mrf.mxu0
        %v572 = vadd.f32 %v538, %v571
        %573 = vmatmul.f32.gmra.mxu0 %v477
        %v574 = vpop.f32.mrf.mxu0
        %v575 = vadd.f32 %v538, %v574
        %576 = vmatmul.f32.gmra.mxu0 %v478
        %v577 = vpop.f32.mrf.mxu0
        %v578 = vadd.f32 %v538, %v577
        %579 = vmatmul.f32.gmra.mxu0 %v479
        %v580 = vpop.f32.mrf.mxu0
        %v581 = vadd.f32 %v538, %v580
        %582 = vmatmul.f32.gmra.mxu0 %v480
        %v583 = vpop.f32.mrf.mxu0
        %v584 = vadd.f32 %v538, %v583
        %585 = vmatmul.f32.gmra.mxu0 %v481
        %v586 = vpop.f32.mrf.mxu0
        %v587 = vadd.f32 %v538, %v586
        %588 = vmatmul.f32.gmra.mxu0 %v482
        %v589 = vpop.f32.mrf.mxu0
        %v590 = vadd.f32 %v538, %v589
        %591 = vmatmul.f32.gmra.mxu0 %v483
        %v592 = vpop.f32.mrf.mxu0
        %v593 = vadd.f32 %v538, %v592
        %594 = vmatmul.f32.gmra.mxu0 %v484
        %v595 = vpop.f32.mrf.mxu0
        %v596 = vadd.f32 %v538, %v595
        %597 = vmatmul.f32.gmra.mxu0 %v485
        %v598 = vpop.f32.mrf.mxu0
        %v599 = vadd.f32 %v538, %v598
        %600 = vmatmul.f32.gmra.mxu0 %v486
        %v601 = vpop.f32.mrf.mxu0
        %v602 = vadd.f32 %v538, %v601
        %603 = vmatmul.f32.gmra.mxu0 %v487
        %v604 = vpop.f32.mrf.mxu0
        %v605 = vadd.f32 %v538, %v604
        %606 = vmatmul.f32.gmra.mxu0 %v488
        %v607 = vpop.f32.mrf.mxu0
        %v608 = vadd.f32 %v538, %v607
        %609 = vmatmul.f32.gmra.mxu0 %v489
        %v610 = vpop.f32.mrf.mxu0
        %v611 = vadd.f32 %v538, %v610
        %612 = vmatmul.f32.gmra.mxu0 %v490
        %v613 = vpop.f32.mrf.mxu0
        %v614 = vadd.f32 %v538, %v613
        %615 = vmatmul.f32.gmra.mxu0 %v491
        %v616 = vpop.f32.mrf.mxu0
        %v617 = vadd.f32 %v538, %v616
        %618 = vmatmul.f32.gmra.mxu0 %v492
        %v619 = vpop.f32.mrf.mxu0
        %v620 = vadd.f32 %v538, %v619
        %621 = vmatmul.f32.gmra.mxu0 %v493
        %v622 = vpop.f32.mrf.mxu0
        %v623 = vadd.f32 %v538, %v622
        %624 = vmatmul.f32.gmra.mxu0 %v494
        %v625 = vpop.f32.mrf.mxu0
        %v626 = vadd.f32 %v538, %v625
        %627 = vmatmul.f32.gmra.mxu0 %v495
        %v628 = vpop.f32.mrf.mxu0
        %v629 = vadd.f32 %v538, %v628
        %630 = vmatmul.f32.gmra.mxu0 %v496
        %v631 = vpop.f32.mrf.mxu0
        %v632 = vadd.f32 %v538, %v631
        %633 = vmatmul.f32.gmra.mxu0 %v497
        %v634 = vpop.f32.mrf.mxu0
        %v635 = vadd.f32 %v538, %v634
        %636 = vmatmul.f32.gmra.mxu0 %v498
        %v637 = vpop.f32.mrf.mxu0
        %v638 = vadd.f32 %v538, %v637
        %639 = vmatmul.f32.gmra.mxu0 %v499
        %v640 = vpop.f32.mrf.mxu0
        %v641 = vadd.f32 %v538, %v640
        %642 = vmatmul.f32.gmra.mxu0 %v500
        %v643 = vpop.f32.mrf.mxu0
        %v644 = vadd.f32 %v538, %v643
        %645 = vmatmul.f32.gmra.mxu0 %v501
        %v646 = vpop.f32.mrf.mxu0
        %v647 = vadd.f32 %v538, %v646
        %648 = vmatmul.f32.gmra.mxu0 %v502
        %v649 = vpop.f32.mrf.mxu0
        %v650 = vadd.f32 %v538, %v649
        %651 = vmatmul.f32.gmra.mxu0 %v503
        %v652 = vpop.f32.mrf.mxu0
        %v653 = vadd.f32 %v538, %v652
        %654 = vdwg.mxu0
        %655 = vmatpush.msra.mxu0 %v535
        %656 = vmatpush.msra.mxu0 %v533
        %657 = vmatpush.msra.mxu0 %v531
        %658 = vmatpush.msra.mxu0 %v529
        %659 = vmatpush.msra.mxu0 %v527
        %660 = vmatpush.msra.mxu0 %v525
        %661 = vmatpush.msra.mxu0 %v523
        %662 = vmatpush.msra.mxu0 %v521
        %663 = vmatpush.msra.mxu0 %v519
        %664 = vmatpush.msra.mxu0 %v517
        %665 = vmatpush.msra.mxu0 %v515
        %666 = vmatpush.msra.mxu0 %v513
        %667 = vmatpush.msra.mxu0 %v511
        %668 = vmatpush.msra.mxu0 %v509
        %669 = vmatpush.msra.mxu0 %v507
        %670 = vmatpush.msra.mxu0 %v505
        %671 = vmatmul.f32.gmra.mxu0 %v472
        %v672 = vpop.f32.mrf.mxu0
        %v673 = vadd.f32 %v539, %v672
        %674 = vmatmul.f32.gmra.mxu0 %v473
        %v675 = vpop.f32.mrf.mxu0
        %v676 = vadd.f32 %v539, %v675
        %677 = vmatmul.f32.gmra.mxu0 %v474
        %v678 = vpop.f32.mrf.mxu0
        %v679 = vadd.f32 %v539, %v678
        %680 = vmatmul.f32.gmra.mxu0 %v475
        %v681 = vpop.f32.mrf.mxu0
        %v682 = vadd.f32 %v539, %v681
        %683 = vmatmul.f32.gmra.mxu0 %v476
        %v684 = vpop.f32.mrf.mxu0
        %v685 = vadd.f32 %v539, %v684
        %686 = vmatmul.f32.gmra.mxu0 %v477
        %v687 = vpop.f32.mrf.mxu0
        %v688 = vadd.f32 %v539, %v687
        %689 = vmatmul.f32.gmra.mxu0 %v478
        %v690 = vpop.f32.mrf.mxu0
        %v691 = vadd.f32 %v539, %v690
        %692 = vmatmul.f32.gmra.mxu0 %v479
        %v693 = vpop.f32.mrf.mxu0
        %v694 = vadd.f32 %v539, %v693
        %695 = vmatmul.f32.gmra.mxu0 %v480
        %v696 = vpop.f32.mrf.mxu0
        %v697 = vadd.f32 %v539, %v696
        %698 = vmatmul.f32.gmra.mxu0 %v481
        %v699 = vpop.f32.mrf.mxu0
        %v700 = vadd.f32 %v539, %v699
        %701 = vmatmul.f32.gmra.mxu0 %v482
        %v702 = vpop.f32.mrf.mxu0
        %v703 = vadd.f32 %v539, %v702
        %704 = vmatmul.f32.gmra.mxu0 %v483
        %v705 = vpop.f32.mrf.mxu0
        %v706 = vadd.f32 %v539, %v705
        %707 = vmatmul.f32.gmra.mxu0 %v484
        %v708 = vpop.f32.mrf.mxu0
        %v709 = vadd.f32 %v539, %v708
        %710 = vmatmul.f32.gmra.mxu0 %v485
        %v711 = vpop.f32.mrf.mxu0
        %v712 = vadd.f32 %v539, %v711
        %713 = vmatmul.f32.gmra.mxu0 %v486
        %v714 = vpop.f32.mrf.mxu0
        %v715 = vadd.f32 %v539, %v714
        %716 = vmatmul.f32.gmra.mxu0 %v487
        %v717 = vpop.f32.mrf.mxu0
        %v718 = vadd.f32 %v539, %v717
        %719 = vmatmul.f32.gmra.mxu0 %v488
        %v720 = vpop.f32.mrf.mxu0
        %v721 = vadd.f32 %v539, %v720
        %722 = vmatmul.f32.gmra.mxu0 %v489
        %v723 = vpop.f32.mrf.mxu0
        %v724 = vadd.f32 %v539, %v723
        %725 = vmatmul.f32.gmra.mxu0 %v490
        %v726 = vpop.f32.mrf.mxu0
        %v727 = vadd.f32 %v539, %v726
        %728 = vmatmul.f32.gmra.mxu0 %v491
        %v729 = vpop.f32.mrf.mxu0
        %v730 = vadd.f32 %v539, %v729
        %731 = vmatmul.f32.gmra.mxu0 %v492
        %v732 = vpop.f32.mrf.mxu0
        %v733 = vadd.f32 %v539, %v732
        %734 = vmatmul.f32.gmra.mxu0 %v493
        %v735 = vpop.f32.mrf.mxu0
        %v736 = vadd.f32 %v539, %v735
        %737 = vmatmul.f32.gmra.mxu0 %v494
        %v738 = vpop.f32.mrf.mxu0
        %v739 = vadd.f32 %v539, %v738
        %740 = vmatmul.f32.gmra.mxu0 %v495
        %v741 = vpop.f32.mrf.mxu0
        %v742 = vadd.f32 %v539, %v741
        %743 = vmatmul.f32.gmra.mxu0 %v496
        %v744 = vpop.f32.mrf.mxu0
        %v745 = vadd.f32 %v539, %v744
        %746 = vmatmul.f32.gmra.mxu0 %v497
        %v747 = vpop.f32.mrf.mxu0
        %v748 = vadd.f32 %v539, %v747
        %749 = vmatmul.f32.gmra.mxu0 %v498
        %v750 = vpop.f32.mrf.mxu0
        %v751 = vadd.f32 %v539, %v750
        %752 = vmatmul.f32.gmra.mxu0 %v499
        %v753 = vpop.f32.mrf.mxu0
        %v754 = vadd.f32 %v539, %v753
        %755 = vmatmul.f32.gmra.mxu0 %v500
        %v756 = vpop.f32.mrf.mxu0
        %v757 = vadd.f32 %v539, %v756
        %758 = vmatmul.f32.gmra.mxu0 %v501
        %v759 = vpop.f32.mrf.mxu0
        %v760 = vadd.f32 %v539, %v759
        %761 = vmatmul.f32.gmra.mxu0 %v502
        %v762 = vpop.f32.mrf.mxu0
        %v763 = vadd.f32 %v539, %v762
        %764 = vmatmul.f32.gmra.mxu0 %v503
        %v765 = vpop.f32.mrf.mxu0
        %v766 = vadd.f32 %v539, %v765
        %767 = vdwg.mxu0
        %v768 = vmax.f32 %v560, 0.0
        %v769 = vmax.f32 %v673, 0.0
        %v770 = vmax.f32 %v563, 0.0
        %v771 = vmax.f32 %v676, 0.0
        %v772 = vmax.f32 %v566, 0.0
        %v773 = vmax.f32 %v679, 0.0
        %v774 = vmax.f32 %v569, 0.0
        %v775 = vmax.f32 %v682, 0.0
        %v776 = vmax.f32 %v572, 0.0
        %v777 = vmax.f32 %v685, 0.0
        %v778 = vmax.f32 %v575, 0.0
        %v779 = vmax.f32 %v688, 0.0
        %v780 = vmax.f32 %v578, 0.0
        %v781 = vmax.f32 %v691, 0.0
        %v782 = vmax.f32 %v581, 0.0
        %v783 = vmax.f32 %v694, 0.0
        %v784 = vmax.f32 %v584, 0.0
        %v785 = vmax.f32 %v697, 0.0
        %v786 = vmax.f32 %v587, 0.0
        %v787 = vmax.f32 %v700, 0.0
        %v788 = vmax.f32 %v590, 0.0
        %v789 = vmax.f32 %v703, 0.0
        %v790 = vmax.f32 %v593, 0.0
        %v791 = vmax.f32 %v706, 0.0
        %v792 = vmax.f32 %v596, 0.0
        %v793 = vmax.f32 %v709, 0.0
        %v794 = vmax.f32 %v599, 0.0
        %v795 = vmax.f32 %v712, 0.0
        %v796 = vmax.f32 %v602, 0.0
        %v797 = vmax.f32 %v715, 0.0
        %v798 = vmax.f32 %v605, 0.0
        %v799 = vmax.f32 %v718, 0.0
        %v800 = vmax.f32 %v608, 0.0
        %v801 = vmax.f32 %v721, 0.0
        %v802 = vmax.f32 %v611, 0.0
        %v803 = vmax.f32 %v724, 0.0
        %v804 = vmax.f32 %v614, 0.0
        %v805 = vmax.f32 %v727, 0.0
        %v806 = vmax.f32 %v617, 0.0
        %v807 = vmax.f32 %v730, 0.0
        %v808 = vmax.f32 %v620, 0.0
        %v809 = vmax.f32 %v733, 0.0
        %v810 = vmax.f32 %v623, 0.0
        %v811 = vmax.f32 %v736, 0.0
        %v812 = vmax.f32 %v626, 0.0
        %v813 = vmax.f32 %v739, 0.0
        %v814 = vmax.f32 %v629, 0.0
        %v815 = vmax.f32 %v742, 0.0
        %v816 = vmax.f32 %v632, 0.0
        %v817 = vmax.f32 %v745, 0.0
        %v818 = vmax.f32 %v635, 0.0
        %v819 = vmax.f32 %v748, 0.0
        %v820 = vmax.f32 %v638, 0.0
        %v821 = vmax.f32 %v751, 0.0
        %v822 = vmax.f32 %v641, 0.0
        %v823 = vmax.f32 %v754, 0.0
        %v824 = vmax.f32 %v644, 0.0
        %v825 = vmax.f32 %v757, 0.0
        %v826 = vmax.f32 %v647, 0.0
        %v827 = vmax.f32 %v760, 0.0
        %v828 = vmax.f32 %v650, 0.0
        %v829 = vmax.f32 %v763, 0.0
        %v830 = vmax.f32 %v653, 0.0
        %v831 = vmax.f32 %v766, 0.0
        %v832 = vld [vmem:[#allocation2] sm:$0xff]
        %v833 = vld [vmem:[#allocation2 + $0x8] sm:$0xff]
        %v834 = vld [vmem:[#allocation2 + $0x10] sm:$0xff]
        %v835 = vld [vmem:[#allocation2 + $0x18] sm:$0xff]
        %v836 = vld [vmem:[#allocation2 + $0x20] sm:$0xff]
        %v837 = vld [vmem:[#allocation2 + $0x28] sm:$0xff]
        %v838 = vld [vmem:[#allocation2 + $0x30] sm:$0xff]
        %v839 = vld [vmem:[#allocation2 + $0x38] sm:$0xff]
        %v840 = vld [vmem:[#allocation2 + $0x40] sm:$0xff]
        %v841 = vld [vmem:[#allocation2 + $0x48] sm:$0xff]
        %v842 = vld [vmem:[#allocation2 + $0x50] sm:$0xff]
        %v843 = vld [vmem:[#allocation2 + $0x58] sm:$0xff]
        %v844 = vld [vmem:[#allocation2 + $0x60] sm:$0xff]
        %v845 = vld [vmem:[#allocation2 + $0x68] sm:$0xff]
        %v846 = vld [vmem:[#allocation2 + $0x70] sm:$0xff]
        %v847 = vld [vmem:[#allocation2 + $0x78] sm:$0xff]
        %v848 = vld [vmem:[#allocation2 + $0x80] sm:$0xff]
        %v849 = vld [vmem:[#allocation2 + $0x88] sm:$0xff]
        %v850 = vld [vmem:[#allocation2 + $0x90] sm:$0xff]
        %v851 = vld [vmem:[#allocation2 + $0x98] sm:$0xff]
        %v852 = vld [vmem:[#allocation2 + $0xa0] sm:$0xff]
        %v853 = vld [vmem:[#allocation2 + $0xa8] sm:$0xff]
        %v854 = vld [vmem:[#allocation2 + $0xb0] sm:$0xff]
        %v855 = vld [vmem:[#allocation2 + $0xb8] sm:$0xff]
        %v856 = vld [vmem:[#allocation2 + $0xc0] sm:$0xff]
        %v857 = vld [vmem:[#allocation2 + $0xc8] sm:$0xff]
        %v858 = vld [vmem:[#allocation2 + $0xd0] sm:$0xff]
        %v859 = vld [vmem:[#allocation2 + $0xd8] sm:$0xff]
        %v860 = vld [vmem:[#allocation2 + $0xe0] sm:$0xff]
        %v861 = vld [vmem:[#allocation2 + $0xe8] sm:$0xff]
        %v862 = vld [vmem:[#allocation2 + $0xf0] sm:$0xff]
        %v863 = vld [vmem:[#allocation2 + $0xf8] sm:$0xff]
        %v864 = vld [vmem:[%s384] sm:$0xff]
        %v865 = vld [vmem:[%s384 + $0x8] sm:$0xff]
        %v866 = vld [vmem:[%s384 + $0x10] sm:$0xff]
        %v867 = vld [vmem:[%s384 + $0x18] sm:$0xff]
        %v868 = vld [vmem:[%s384 + $0x20] sm:$0xff]
        %v869 = vld [vmem:[%s384 + $0x28] sm:$0xff]
        %v870 = vld [vmem:[%s384 + $0x30] sm:$0xff]
        %v871 = vld [vmem:[%s384 + $0x38] sm:$0xff]
        %v872 = vld [vmem:[%s384 + $0x40] sm:$0xff]
        %v873 = vld [vmem:[%s384 + $0x48] sm:$0xff]
        %v874 = vld [vmem:[%s384 + $0x50] sm:$0xff]
        %v875 = vld [vmem:[%s384 + $0x58] sm:$0xff]
        %v876 = vld [vmem:[%s384 + $0x60] sm:$0xff]
        %v877 = vld [vmem:[%s384 + $0x68] sm:$0xff]
        %v878 = vld [vmem:[%s384 + $0x70] sm:$0xff]
        %v879 = vld [vmem:[%s384 + $0x78] sm:$0xff]
        %v880 = vld [vmem:[%s384 + $0x80] sm:$0xff]
        %v881 = vld [vmem:[%s384 + $0x88] sm:$0xff]
        %v882 = vld [vmem:[%s384 + $0x90] sm:$0xff]
        %v883 = vld [vmem:[%s384 + $0x98] sm:$0xff]
        %v884 = vld [vmem:[%s384 + $0xa0] sm:$0xff]
        %v885 = vld [vmem:[%s384 + $0xa8] sm:$0xff]
        %v886 = vld [vmem:[%s384 + $0xb0] sm:$0xff]
        %v887 = vld [vmem:[%s384 + $0xb8] sm:$0xff]
        %v888 = vld [vmem:[%s384 + $0xc0] sm:$0xff]
        %v889 = vld [vmem:[%s384 + $0xc8] sm:$0xff]
        %v890 = vld [vmem:[%s384 + $0xd0] sm:$0xff]
        %v891 = vld [vmem:[%s384 + $0xd8] sm:$0xff]
        %v892 = vld [vmem:[%s384 + $0xe0] sm:$0xff]
        %v893 = vld [vmem:[%s384 + $0xe8] sm:$0xff]
        %v894 = vld [vmem:[%s384 + $0xf0] sm:$0xff]
        %v895 = vld [vmem:[%s384 + $0xf8] sm:$0xff]
        %896 = vmatpush.msra.mxu0 %v879
        %897 = vmatpush.msra.mxu0 %v878
        %898 = vmatpush.msra.mxu0 %v877
        %899 = vmatpush.msra.mxu0 %v876
        %900 = vmatpush.msra.mxu0 %v875
        %901 = vmatpush.msra.mxu0 %v874
        %902 = vmatpush.msra.mxu0 %v873
        %903 = vmatpush.msra.mxu0 %v872
        %904 = vmatpush.msra.mxu0 %v871
        %905 = vmatpush.msra.mxu0 %v870
        %906 = vmatpush.msra.mxu0 %v869
        %907 = vmatpush.msra.mxu0 %v868
        %908 = vmatpush.msra.mxu0 %v867
        %909 = vmatpush.msra.mxu0 %v866
        %910 = vmatpush.msra.mxu0 %v865
        %911 = vmatpush.msra.mxu0 %v864
        %912 = vmatmul.f32.gmra.mxu0 %v768
        %v913 = vpop.f32.mrf.mxu0
        %v914 = vadd.f32 0.0, %v913
        %915 = vmatmul.f32.gmra.mxu0 %v770
        %v916 = vpop.f32.mrf.mxu0
        %v917 = vadd.f32 0.0, %v916
        %918 = vmatmul.f32.gmra.mxu0 %v772
        %v919 = vpop.f32.mrf.mxu0
        %v920 = vadd.f32 0.0, %v919
        %921 = vmatmul.f32.gmra.mxu0 %v774
        %v922 = vpop.f32.mrf.mxu0
        %v923 = vadd.f32 0.0, %v922
        %924 = vmatmul.f32.gmra.mxu0 %v776
        %v925 = vpop.f32.mrf.mxu0
        %v926 = vadd.f32 0.0, %v925
        %927 = vmatmul.f32.gmra.mxu0 %v778
        %v928 = vpop.f32.mrf.mxu0
        %v929 = vadd.f32 0.0, %v928
        %930 = vmatmul.f32.gmra.mxu0 %v780
        %v931 = vpop.f32.mrf.mxu0
        %v932 = vadd.f32 0.0, %v931
        %933 = vmatmul.f32.gmra.mxu0 %v782
        %v934 = vpop.f32.mrf.mxu0
        %v935 = vadd.f32 0.0, %v934
        %936 = vmatmul.f32.gmra.mxu0 %v784
        %v937 = vpop.f32.mrf.mxu0
        %v938 = vadd.f32 0.0, %v937
        %939 = vmatmul.f32.gmra.mxu0 %v786
        %v940 = vpop.f32.mrf.mxu0
        %v941 = vadd.f32 0.0, %v940
        %942 = vmatmul.f32.gmra.mxu0 %v788
        %v943 = vpop.f32.mrf.mxu0
        %v944 = vadd.f32 0.0, %v943
        %945 = vmatmul.f32.gmra.mxu0 %v790
        %v946 = vpop.f32.mrf.mxu0
        %v947 = vadd.f32 0.0, %v946
        %948 = vmatmul.f32.gmra.mxu0 %v792
        %v949 = vpop.f32.mrf.mxu0
        %v950 = vadd.f32 0.0, %v949
        %951 = vmatmul.f32.gmra.mxu0 %v794
        %v952 = vpop.f32.mrf.mxu0
        %v953 = vadd.f32 0.0, %v952
        %954 = vmatmul.f32.gmra.mxu0 %v796
        %v955 = vpop.f32.mrf.mxu0
        %v956 = vadd.f32 0.0, %v955
        %957 = vmatmul.f32.gmra.mxu0 %v798
        %v958 = vpop.f32.mrf.mxu0
        %v959 = vadd.f32 0.0, %v958
        %960 = vmatmul.f32.gmra.mxu0 %v800
        %v961 = vpop.f32.mrf.mxu0
        %v962 = vadd.f32 0.0, %v961
        %963 = vmatmul.f32.gmra.mxu0 %v802
        %v964 = vpop.f32.mrf.mxu0
        %v965 = vadd.f32 0.0, %v964
        %966 = vmatmul.f32.gmra.mxu0 %v804
        %v967 = vpop.f32.mrf.mxu0
        %v968 = vadd.f32 0.0, %v967
        %969 = vmatmul.f32.gmra.mxu0 %v806
        %v970 = vpop.f32.mrf.mxu0
        %v971 = vadd.f32 0.0, %v970
        %972 = vmatmul.f32.gmra.mxu0 %v808
        %v973 = vpop.f32.mrf.mxu0
        %v974 = vadd.f32 0.0, %v973
        %975 = vmatmul.f32.gmra.mxu0 %v810
        %v976 = vpop.f32.mrf.mxu0
        %v977 = vadd.f32 0.0, %v976
        %978 = vmatmul.f32.gmra.mxu0 %v812
        %v979 = vpop.f32.mrf.mxu0
        %v980 = vadd.f32 0.0, %v979
        %981 = vmatmul.f32.gmra.mxu0 %v814
        %v982 = vpop.f32.mrf.mxu0
        %v983 = vadd.f32 0.0, %v982
        %984 = vmatmul.f32.gmra.mxu0 %v816
        %v985 = vpop.f32.mrf.mxu0
        %v986 = vadd.f32 0.0, %v985
        %987 = vmatmul.f32.gmra.mxu0 %v818
        %v988 = vpop.f32.mrf.mxu0
        %v989 = vadd.f32 0.0, %v988
        %990 = vmatmul.f32.gmra.mxu0 %v820
        %v991 = vpop.f32.mrf.mxu0
        %v992 = vadd.f32 0.0, %v991
        %993 = vmatmul.f32.gmra.mxu0 %v822
        %v994 = vpop.f32.mrf.mxu0
        %v995 = vadd.f32 0.0, %v994
        %996 = vmatmul.f32.gmra.mxu0 %v824
        %v997 = vpop.f32.mrf.mxu0
        %v998 = vadd.f32 0.0, %v997
        %999 = vmatmul.f32.gmra.mxu0 %v826
        %v1000 = vpop.f32.mrf.mxu0
        %v1001 = vadd.f32 0.0, %v1000
        %1002 = vmatmul.f32.gmra.mxu0 %v828
        %v1003 = vpop.f32.mrf.mxu0
        %v1004 = vadd.f32 0.0, %v1003
        %1005 = vmatmul.f32.gmra.mxu0 %v830
        %v1006 = vpop.f32.mrf.mxu0
        %v1007 = vadd.f32 0.0, %v1006
        %1008 = vdwg.mxu0
        %1009 = vmatpush.msra.mxu0 %v895
        %1010 = vmatpush.msra.mxu0 %v894
        %1011 = vmatpush.msra.mxu0 %v893
        %1012 = vmatpush.msra.mxu0 %v892
        %1013 = vmatpush.msra.mxu0 %v891
        %1014 = vmatpush.msra.mxu0 %v890
        %1015 = vmatpush.msra.mxu0 %v889
        %1016 = vmatpush.msra.mxu0 %v888
        %1017 = vmatpush.msra.mxu0 %v887
        %1018 = vmatpush.msra.mxu0 %v886
        %1019 = vmatpush.msra.mxu0 %v885
        %1020 = vmatpush.msra.mxu0 %v884
        %1021 = vmatpush.msra.mxu0 %v883
        %1022 = vmatpush.msra.mxu0 %v882
        %1023 = vmatpush.msra.mxu0 %v881
        %1024 = vmatpush.msra.mxu0 %v880
        %1025 = vmatmul.f32.gmra.mxu0 %v769
        %v1026 = vpop.f32.mrf.mxu0
        %v1027 = vadd.f32 %v914, %v1026
        %1028 = vmatmul.f32.gmra.mxu0 %v771
        %v1029 = vpop.f32.mrf.mxu0
        %v1030 = vadd.f32 %v917, %v1029
        %1031 = vmatmul.f32.gmra.mxu0 %v773
        %v1032 = vpop.f32.mrf.mxu0
        %v1033 = vadd.f32 %v920, %v1032
        %1034 = vmatmul.f32.gmra.mxu0 %v775
        %v1035 = vpop.f32.mrf.mxu0
        %v1036 = vadd.f32 %v923, %v1035
        %1037 = vmatmul.f32.gmra.mxu0 %v777
        %v1038 = vpop.f32.mrf.mxu0
        %v1039 = vadd.f32 %v926, %v1038
        %1040 = vmatmul.f32.gmra.mxu0 %v779
        %v1041 = vpop.f32.mrf.mxu0
        %v1042 = vadd.f32 %v929, %v1041
        %1043 = vmatmul.f32.gmra.mxu0 %v781
        %v1044 = vpop.f32.mrf.mxu0
        %v1045 = vadd.f32 %v932, %v1044
        %1046 = vmatmul.f32.gmra.mxu0 %v783
        %v1047 = vpop.f32.mrf.mxu0
        %v1048 = vadd.f32 %v935, %v1047
        %1049 = vmatmul.f32.gmra.mxu0 %v785
        %v1050 = vpop.f32.mrf.mxu0
        %v1051 = vadd.f32 %v938, %v1050
        %1052 = vmatmul.f32.gmra.mxu0 %v787
        %v1053 = vpop.f32.mrf.mxu0
        %v1054 = vadd.f32 %v941, %v1053
        %1055 = vmatmul.f32.gmra.mxu0 %v789
        %v1056 = vpop.f32.mrf.mxu0
        %v1057 = vadd.f32 %v944, %v1056
        %1058 = vmatmul.f32.gmra.mxu0 %v791
        %v1059 = vpop.f32.mrf.mxu0
        %v1060 = vadd.f32 %v947, %v1059
        %1061 = vmatmul.f32.gmra.mxu0 %v793
        %v1062 = vpop.f32.mrf.mxu0
        %v1063 = vadd.f32 %v950, %v1062
        %1064 = vmatmul.f32.gmra.mxu0 %v795
        %v1065 = vpop.f32.mrf.mxu0
        %v1066 = vadd.f32 %v953, %v1065
        %1067 = vmatmul.f32.gmra.mxu0 %v797
        %v1068 = vpop.f32.mrf.mxu0
        %v1069 = vadd.f32 %v956, %v1068
        %1070 = vmatmul.f32.gmra.mxu0 %v799
        %v1071 = vpop.f32.mrf.mxu0
        %v1072 = vadd.f32 %v959, %v1071
        %1073 = vmatmul.f32.gmra.mxu0 %v801
        %v1074 = vpop.f32.mrf.mxu0
        %v1075 = vadd.f32 %v962, %v1074
        %1076 = vmatmul.f32.gmra.mxu0 %v803
        %v1077 = vpop.f32.mrf.mxu0
        %v1078 = vadd.f32 %v965, %v1077
        %1079 = vmatmul.f32.gmra.mxu0 %v805
        %v1080 = vpop.f32.mrf.mxu0
        %v1081 = vadd.f32 %v968, %v1080
        %1082 = vmatmul.f32.gmra.mxu0 %v807
        %v1083 = vpop.f32.mrf.mxu0
        %v1084 = vadd.f32 %v971, %v1083
        %1085 = vmatmul.f32.gmra.mxu0 %v809
        %v1086 = vpop.f32.mrf.mxu0
        %v1087 = vadd.f32 %v974, %v1086
        %1088 = vmatmul.f32.gmra.mxu0 %v811
        %v1089 = vpop.f32.mrf.mxu0
        %v1090 = vadd.f32 %v977, %v1089
        %1091 = vmatmul.f32.gmra.mxu0 %v813
        %v1092 = vpop.f32.mrf.mxu0
        %v1093 = vadd.f32 %v980, %v1092
        %1094 = vmatmul.f32.gmra.mxu0 %v815
        %v1095 = vpop.f32.mrf.mxu0
        %v1096 = vadd.f32 %v983, %v1095
        %1097 = vmatmul.f32.gmra.mxu0 %v817
        %v1098 = vpop.f32.mrf.mxu0
        %v1099 = vadd.f32 %v986, %v1098
        %1100 = vmatmul.f32.gmra.mxu0 %v819
        %v1101 = vpop.f32.mrf.mxu0
        %v1102 = vadd.f32 %v989, %v1101
        %1103 = vmatmul.f32.gmra.mxu0 %v821
        %v1104 = vpop.f32.mrf.mxu0
        %v1105 = vadd.f32 %v992, %v1104
        %1106 = vmatmul.f32.gmra.mxu0 %v823
        %v1107 = vpop.f32.mrf.mxu0
        %v1108 = vadd.f32 %v995, %v1107
        %1109 = vmatmul.f32.gmra.mxu0 %v825
        %v1110 = vpop.f32.mrf.mxu0
        %v1111 = vadd.f32 %v998, %v1110
        %1112 = vmatmul.f32.gmra.mxu0 %v827
        %v1113 = vpop.f32.mrf.mxu0
        %v1114 = vadd.f32 %v1001, %v1113
        %1115 = vmatmul.f32.gmra.mxu0 %v829
        %v1116 = vpop.f32.mrf.mxu0
        %v1117 = vadd.f32 %v1004, %v1116
        %1118 = vmatmul.f32.gmra.mxu0 %v831
        %v1119 = vpop.f32.mrf.mxu0
        %v1120 = vadd.f32 %v1007, %v1119
        %1121 = vdwg.mxu0
        %v1122 = vadd.f32 %v832, %v1027
        %v1123 = vadd.f32 %v833, %v1030
        %v1124 = vadd.f32 %v834, %v1033
        %v1125 = vadd.f32 %v835, %v1036
        %v1126 = vadd.f32 %v836, %v1039
        %v1127 = vadd.f32 %v837, %v1042
        %v1128 = vadd.f32 %v838, %v1045
        %v1129 = vadd.f32 %v839, %v1048
        %v1130 = vadd.f32 %v840, %v1051
        %v1131 = vadd.f32 %v841, %v1054
        %v1132 = vadd.f32 %v842, %v1057
        %v1133 = vadd.f32 %v843, %v1060
        %v1134 = vadd.f32 %v844, %v1063
        %v1135 = vadd.f32 %v845, %v1066
        %v1136 = vadd.f32 %v846, %v1069
        %v1137 = vadd.f32 %v847, %v1072
        %v1138 = vadd.f32 %v848, %v1075
        %v1139 = vadd.f32 %v849, %v1078
        %v1140 = vadd.f32 %v850, %v1081
        %v1141 = vadd.f32 %v851, %v1084
        %v1142 = vadd.f32 %v852, %v1087
        %v1143 = vadd.f32 %v853, %v1090
        %v1144 = vadd.f32 %v854, %v1093
        %v1145 = vadd.f32 %v855, %v1096
        %v1146 = vadd.f32 %v856, %v1099
        %v1147 = vadd.f32 %v857, %v1102
        %v1148 = vadd.f32 %v858, %v1105
        %v1149 = vadd.f32 %v859, %v1108
        %v1150 = vadd.f32 %v860, %v1111
        %v1151 = vadd.f32 %v861, %v1114
        %v1152 = vadd.f32 %v862, %v1117
        %v1153 = vadd.f32 %v863, %v1120
        %1154 = vst [vmem:[#allocation2] sm:$0xff] %v1122
        %1155 = vst [vmem:[#allocation2 + $0x8] sm:$0xff] %v1123
        %1156 = vst [vmem:[#allocation2 + $0x10] sm:$0xff] %v1124
        %1157 = vst [vmem:[#allocation2 + $0x18] sm:$0xff] %v1125
        %1158 = vst [vmem:[#allocation2 + $0x20] sm:$0xff] %v1126
        %1159 = vst [vmem:[#allocation2 + $0x28] sm:$0xff] %v1127
        %1160 = vst [vmem:[#allocation2 + $0x30] sm:$0xff] %v1128
        %1161 = vst [vmem:[#allocation2 + $0x38] sm:$0xff] %v1129
        %1162 = vst [vmem:[#allocation2 + $0x40] sm:$0xff] %v1130
        %1163 = vst [vmem:[#allocation2 + $0x48] sm:$0xff] %v1131
        %1164 = vst [vmem:[#allocation2 + $0x50] sm:$0xff] %v1132
        %1165 = vst [vmem:[#allocation2 + $0x58] sm:$0xff] %v1133
        %1166 = vst [vmem:[#allocation2 + $0x60] sm:$0xff] %v1134
        %1167 = vst [vmem:[#allocation2 + $0x68] sm:$0xff] %v1135
        %1168 = vst [vmem:[#allocation2 + $0x70] sm:$0xff] %v1136
        %1169 = vst [vmem:[#allocation2 + $0x78] sm:$0xff] %v1137
        %1170 = vst [vmem:[#allocation2 + $0x80] sm:$0xff] %v1138
        %1171 = vst [vmem:[#allocation2 + $0x88] sm:$0xff] %v1139
        %1172 = vst [vmem:[#allocation2 + $0x90] sm:$0xff] %v1140
        %1173 = vst [vmem:[#allocation2 + $0x98] sm:$0xff] %v1141
        %1174 = vst [vmem:[#allocation2 + $0xa0] sm:$0xff] %v1142
        %1175 = vst [vmem:[#allocation2 + $0xa8] sm:$0xff] %v1143
        %1176 = vst [vmem:[#allocation2 + $0xb0] sm:$0xff] %v1144
        %1177 = vst [vmem:[#allocation2 + $0xb8] sm:$0xff] %v1145
        %1178 = vst [vmem:[#allocation2 + $0xc0] sm:$0xff] %v1146
        %1179 = vst [vmem:[#allocation2 + $0xc8] sm:$0xff] %v1147
        %1180 = vst [vmem:[#allocation2 + $0xd0] sm:$0xff] %v1148
        %1181 = vst [vmem:[#allocation2 + $0xd8] sm:$0xff] %v1149
        %1182 = vst [vmem:[#allocation2 + $0xe0] sm:$0xff] %v1150
        %1183 = vst [vmem:[#allocation2 + $0xe8] sm:$0xff] %v1151
        %1184 = vst [vmem:[#allocation2 + $0xf0] sm:$0xff] %v1152
        %1185 = vst [vmem:[#allocation2 + $0xf8] sm:$0xff] %v1153
        %p1186 = scmp.eq.s32.totalorder %s35, 1
        // Predicated region
        $region69: #{tpu_custom_call.1} parent=47 // pred_check
          %p1187 = pneg %p1186
        $region70: #{tpu_custom_call.1} parent=47 // pred_check_branch
          %1189 = sbr.rel (%p1187) target = $region72
        $region71: #{tpu_custom_call.1} parent=47 // pred_region
          %v1190 = vld [vmem:[#allocation2] sm:$0xff]
          %v1191 = vld [vmem:[#allocation2 + $0x8] sm:$0xff]
          %v1192 = vld [vmem:[#allocation2 + $0x10] sm:$0xff]
          %v1193 = vld [vmem:[#allocation2 + $0x18] sm:$0xff]
          %v1194 = vld [vmem:[#allocation2 + $0x20] sm:$0xff]
          %v1195 = vld [vmem:[#allocation2 + $0x28] sm:$0xff]
          %v1196 = vld [vmem:[#allocation2 + $0x30] sm:$0xff]
          %v1197 = vld [vmem:[#allocation2 + $0x38] sm:$0xff]
          %v1198 = vld [vmem:[#allocation2 + $0x40] sm:$0xff]
          %v1199 = vld [vmem:[#allocation2 + $0x48] sm:$0xff]
          %v1200 = vld [vmem:[#allocation2 + $0x50] sm:$0xff]
          %v1201 = vld [vmem:[#allocation2 + $0x58] sm:$0xff]
          %v1202 = vld [vmem:[#allocation2 + $0x60] sm:$0xff]
          %v1203 = vld [vmem:[#allocation2 + $0x68] sm:$0xff]
          %v1204 = vld [vmem:[#allocation2 + $0x70] sm:$0xff]
          %v1205 = vld [vmem:[#allocation2 + $0x78] sm:$0xff]
          %v1206 = vld [vmem:[#allocation2 + $0x80] sm:$0xff]
          %v1207 = vld [vmem:[#allocation2 + $0x88] sm:$0xff]
          %v1208 = vld [vmem:[#allocation2 + $0x90] sm:$0xff]
          %v1209 = vld [vmem:[#allocation2 + $0x98] sm:$0xff]
          %v1210 = vld [vmem:[#allocation2 + $0xa0] sm:$0xff]
          %v1211 = vld [vmem:[#allocation2 + $0xa8] sm:$0xff]
          %v1212 = vld [vmem:[#allocation2 + $0xb0] sm:$0xff]
          %v1213 = vld [vmem:[#allocation2 + $0xb8] sm:$0xff]
          %v1214 = vld [vmem:[#allocation2 + $0xc0] sm:$0xff]
          %v1215 = vld [vmem:[#allocation2 + $0xc8] sm:$0xff]
          %v1216 = vld [vmem:[#allocation2 + $0xd0] sm:$0xff]
          %v1217 = vld [vmem:[#allocation2 + $0xd8] sm:$0xff]
          %v1218 = vld [vmem:[#allocation2 + $0xe0] sm:$0xff]
          %v1219 = vld [vmem:[#allocation2 + $0xe8] sm:$0xff]
          %v1220 = vld [vmem:[#allocation2 + $0xf0] sm:$0xff]
          %v1221 = vld [vmem:[#allocation2 + $0xf8] sm:$0xff]
          %v1222 = vld [vmem:[%s4] sm:$0x1]
          %v1224 = vperm.slane %v1222, 0
          %v1226 = vadd.f32 %v1190, %v1224
          %v1227 = vadd.f32 %v1191, %v1224
          %v1228 = vadd.f32 %v1192, %v1224
          %v1229 = vadd.f32 %v1193, %v1224
          %v1230 = vadd.f32 %v1194, %v1224
          %v1231 = vadd.f32 %v1195, %v1224
          %v1232 = vadd.f32 %v1196, %v1224
          %v1233 = vadd.f32 %v1197, %v1224
          %v1234 = vadd.f32 %v1198, %v1224
          %v1235 = vadd.f32 %v1199, %v1224
          %v1236 = vadd.f32 %v1200, %v1224
          %v1237 = vadd.f32 %v1201, %v1224
          %v1238 = vadd.f32 %v1202, %v1224
          %v1239 = vadd.f32 %v1203, %v1224
          %v1240 = vadd.f32 %v1204, %v1224
          %v1241 = vadd.f32 %v1205, %v1224
          %v1242 = vadd.f32 %v1206, %v1224
          %v1243 = vadd.f32 %v1207, %v1224
          %v1244 = vadd.f32 %v1208, %v1224
          %v1245 = vadd.f32 %v1209, %v1224
          %v1246 = vadd.f32 %v1210, %v1224
          %v1247 = vadd.f32 %v1211, %v1224
          %v1248 = vadd.f32 %v1212, %v1224
          %v1249 = vadd.f32 %v1213, %v1224
          %v1250 = vadd.f32 %v1214, %v1224
          %v1251 = vadd.f32 %v1215, %v1224
          %v1252 = vadd.f32 %v1216, %v1224
          %v1253 = vadd.f32 %v1217, %v1224
          %v1254 = vadd.f32 %v1218, %v1224
          %v1255 = vadd.f32 %v1219, %v1224
          %v1256 = vadd.f32 %v1220, %v1224
          %v1257 = vadd.f32 %v1221, %v1224
          %v1258 = vmax.f32 %v1226, 0.0
          %v1259 = vmax.f32 %v1227, 0.0
          %v1260 = vmax.f32 %v1228, 0.0
          %v1261 = vmax.f32 %v1229, 0.0
          %v1262 = vmax.f32 %v1230, 0.0
          %v1263 = vmax.f32 %v1231, 0.0
          %v1264 = vmax.f32 %v1232, 0.0
          %v1265 = vmax.f32 %v1233, 0.0
          %v1266 = vmax.f32 %v1234, 0.0
          %v1267 = vmax.f32 %v1235, 0.0
          %v1268 = vmax.f32 %v1236, 0.0
          %v1269 = vmax.f32 %v1237, 0.0
          %v1270 = vmax.f32 %v1238, 0.0
          %v1271 = vmax.f32 %v1239, 0.0
          %v1272 = vmax.f32 %v1240, 0.0
          %v1273 = vmax.f32 %v1241, 0.0
          %v1274 = vmax.f32 %v1242, 0.0
          %v1275 = vmax.f32 %v1243, 0.0
          %v1276 = vmax.f32 %v1244, 0.0
          %v1277 = vmax.f32 %v1245, 0.0
          %v1278 = vmax.f32 %v1246, 0.0
          %v1279 = vmax.f32 %v1247, 0.0
          %v1280 = vmax.f32 %v1248, 0.0
          %v1281 = vmax.f32 %v1249, 0.0
          %v1282 = vmax.f32 %v1250, 0.0
          %v1283 = vmax.f32 %v1251, 0.0
          %v1284 = vmax.f32 %v1252, 0.0
          %v1285 = vmax.f32 %v1253, 0.0
          %v1286 = vmax.f32 %v1254, 0.0
          %v1287 = vmax.f32 %v1255, 0.0
          %v1288 = vmax.f32 %v1256, 0.0
          %v1289 = vmax.f32 %v1257, 0.0
          %v1290 = vadd.f32 %v1258, %v472
          %v1291 = vadd.f32 %v1259, %v473
          %v1292 = vadd.f32 %v1260, %v474
          %v1293 = vadd.f32 %v1261, %v475
          %v1294 = vadd.f32 %v1262, %v476
          %v1295 = vadd.f32 %v1263, %v477
          %v1296 = vadd.f32 %v1264, %v478
          %v1297 = vadd.f32 %v1265, %v479
          %v1298 = vadd.f32 %v1266, %v480
          %v1299 = vadd.f32 %v1267, %v481
          %v1300 = vadd.f32 %v1268, %v482
          %v1301 = vadd.f32 %v1269, %v483
          %v1302 = vadd.f32 %v1270, %v484
          %v1303 = vadd.f32 %v1271, %v485
          %v1304 = vadd.f32 %v1272, %v486
          %v1305 = vadd.f32 %v1273, %v487
          %v1306 = vadd.f32 %v1274, %v488
          %v1307 = vadd.f32 %v1275, %v489
          %v1308 = vadd.f32 %v1276, %v490
          %v1309 = vadd.f32 %v1277, %v491
          %v1310 = vadd.f32 %v1278, %v492
          %v1311 = vadd.f32 %v1279, %v493
          %v1312 = vadd.f32 %v1280, %v494
          %v1313 = vadd.f32 %v1281, %v495
          %v1314 = vadd.f32 %v1282, %v496
          %v1315 = vadd.f32 %v1283, %v497
          %v1316 = vadd.f32 %v1284, %v498
          %v1317 = vadd.f32 %v1285, %v499
          %v1318 = vadd.f32 %v1286, %v500
          %v1319 = vadd.f32 %v1287, %v501
          %v1320 = vadd.f32 %v1288, %v502
          %v1321 = vadd.f32 %v1289, %v503
          %1322 = vadd.xlane.f32.xlu0 %v1290
          %v1323 = vpop.xlane.xlu0 %1322
          %1324 = vadd.xlane.f32.xlu0 %v1291
          %v1325 = vpop.xlane.xlu0 %1324
          %1326 = vadd.xlane.f32.xlu0 %v1292
          %v1327 = vpop.xlane.xlu0 %1326
          %1328 = vadd.xlane.f32.xlu0 %v1293
          %v1329 = vpop.xlane.xlu0 %1328
          %1330 = vadd.xlane.f32.xlu0 %v1294
          %v1331 = vpop.xlane.xlu0 %1330
          %1332 = vadd.xlane.f32.xlu0 %v1295
          %v1333 = vpop.xlane.xlu0 %1332
          %1334 = vadd.xlane.f32.xlu0 %v1296
          %v1335 = vpop.xlane.xlu0 %1334
          %1336 = vadd.xlane.f32.xlu0 %v1297
          %v1337 = vpop.xlane.xlu0 %1336
          %1338 = vadd.xlane.f32.xlu0 %v1298
          %v1339 = vpop.xlane.xlu0 %1338
          %1340 = vadd.xlane.f32.xlu0 %v1299
          %v1341 = vpop.xlane.xlu0 %1340
          %1342 = vadd.xlane.f32.xlu0 %v1300
          %v1343 = vpop.xlane.xlu0 %1342
          %1344 = vadd.xlane.f32.xlu0 %v1301
          %v1345 = vpop.xlane.xlu0 %1344
          %1346 = vadd.xlane.f32.xlu0 %v1302
          %v1347 = vpop.xlane.xlu0 %1346
          %1348 = vadd.xlane.f32.xlu0 %v1303
          %v1349 = vpop.xlane.xlu0 %1348
          %1350 = vadd.xlane.f32.xlu0 %v1304
          %v1351 = vpop.xlane.xlu0 %1350
          %1352 = vadd.xlane.f32.xlu0 %v1305
          %v1353 = vpop.xlane.xlu0 %1352
          %1354 = vadd.xlane.f32.xlu0 %v1306
          %v1355 = vpop.xlane.xlu0 %1354
          %1356 = vadd.xlane.f32.xlu0 %v1307
          %v1357 = vpop.xlane.xlu0 %1356
          %1358 = vadd.xlane.f32.xlu0 %v1308
          %v1359 = vpop.xlane.xlu0 %1358
          %1360 = vadd.xlane.f32.xlu0 %v1309
          %v1361 = vpop.xlane.xlu0 %1360
          %1362 = vadd.xlane.f32.xlu0 %v1310
          %v1363 = vpop.xlane.xlu0 %1362
          %1364 = vadd.xlane.f32.xlu0 %v1311
          %v1365 = vpop.xlane.xlu0 %1364
          %1366 = vadd.xlane.f32.xlu0 %v1312
          %v1367 = vpop.xlane.xlu0 %1366
          %1368 = vadd.xlane.f32.xlu0 %v1313
          %v1369 = vpop.xlane.xlu0 %1368
          %1370 = vadd.xlane.f32.xlu0 %v1314
          %v1371 = vpop.xlane.xlu0 %1370
          %1372 = vadd.xlane.f32.xlu0 %v1315
          %v1373 = vpop.xlane.xlu0 %1372
          %1374 = vadd.xlane.f32.xlu0 %v1316
          %v1375 = vpop.xlane.xlu0 %1374
          %1376 = vadd.xlane.f32.xlu0 %v1317
          %v1377 = vpop.xlane.xlu0 %1376
          %1378 = vadd.xlane.f32.xlu0 %v1318
          %v1379 = vpop.xlane.xlu0 %1378
          %1380 = vadd.xlane.f32.xlu0 %v1319
          %v1381 = vpop.xlane.xlu0 %1380
          %1382 = vadd.xlane.f32.xlu0 %v1320
          %v1383 = vpop.xlane.xlu0 %1382
          %1384 = vadd.xlane.f32.xlu0 %v1321
          %v1385 = vpop.xlane.xlu0 %1384
          %v1386 = vrcp.pop 128.0
          %v1387 = vmul.f32 128.0, %v1386
          %v1388 = vsub.f32 1.0, %v1387
          %v1389 = vmul.f32 %v1386, %v1388
          %v1390 = vadd.f32 %v1386, %v1389
          %vm1391 = vweird.f32 %v1386
          %v1392 = vsel %vm1391, %v1386, %v1390
          %v1393 = vmul.f32 %v1323, %v1392
          %v1394 = vmul.f32 %v1325, %v1392
          %v1395 = vmul.f32 %v1327, %v1392
          %v1396 = vmul.f32 %v1329, %v1392
          %v1397 = vmul.f32 %v1331, %v1392
          %v1398 = vmul.f32 %v1333, %v1392
          %v1399 = vmul.f32 %v1335, %v1392
          %v1400 = vmul.f32 %v1337, %v1392
          %v1401 = vmul.f32 %v1339, %v1392
          %v1402 = vmul.f32 %v1341, %v1392
          %v1403 = vmul.f32 %v1343, %v1392
          %v1404 = vmul.f32 %v1345, %v1392
          %v1405 = vmul.f32 %v1347, %v1392
          %v1406 = vmul.f32 %v1349, %v1392
          %v1407 = vmul.f32 %v1351, %v1392
          %v1408 = vmul.f32 %v1353, %v1392
          %v1409 = vmul.f32 %v1355, %v1392
          %v1410 = vmul.f32 %v1357, %v1392
          %v1411 = vmul.f32 %v1359, %v1392
          %v1412 = vmul.f32 %v1361, %v1392
          %v1413 = vmul.f32 %v1363, %v1392
          %v1414 = vmul.f32 %v1365, %v1392
          %v1415 = vmul.f32 %v1367, %v1392
          %v1416 = vmul.f32 %v1369, %v1392
          %v1417 = vmul.f32 %v1371, %v1392
          %v1418 = vmul.f32 %v1373, %v1392
          %v1419 = vmul.f32 %v1375, %v1392
          %v1420 = vmul.f32 %v1377, %v1392
          %v1421 = vmul.f32 %v1379, %v1392
          %v1422 = vmul.f32 %v1381, %v1392
          %v1423 = vmul.f32 %v1383, %v1392
          %v1424 = vmul.f32 %v1385, %v1392
          %v1425 = vsub.f32 %v1290, %v1393
          %v1426 = vsub.f32 %v1291, %v1394
          %v1427 = vsub.f32 %v1292, %v1395
          %v1428 = vsub.f32 %v1293, %v1396
          %v1429 = vsub.f32 %v1294, %v1397
          %v1430 = vsub.f32 %v1295, %v1398
          %v1431 = vsub.f32 %v1296, %v1399
          %v1432 = vsub.f32 %v1297, %v1400
          %v1433 = vsub.f32 %v1298, %v1401
          %v1434 = vsub.f32 %v1299, %v1402
          %v1435 = vsub.f32 %v1300, %v1403
          %v1436 = vsub.f32 %v1301, %v1404
          %v1437 = vsub.f32 %v1302, %v1405
          %v1438 = vsub.f32 %v1303, %v1406
          %v1439 = vsub.f32 %v1304, %v1407
          %v1440 = vsub.f32 %v1305, %v1408
          %v1441 = vsub.f32 %v1306, %v1409
          %v1442 = vsub.f32 %v1307, %v1410
          %v1443 = vsub.f32 %v1308, %v1411
          %v1444 = vsub.f32 %v1309, %v1412
          %v1445 = vsub.f32 %v1310, %v1413
          %v1446 = vsub.f32 %v1311, %v1414
          %v1447 = vsub.f32 %v1312, %v1415
          %v1448 = vsub.f32 %v1313, %v1416
          %v1449 = vsub.f32 %v1314, %v1417
          %v1450 = vsub.f32 %v1315, %v1418
          %v1451 = vsub.f32 %v1316, %v1419
          %v1452 = vsub.f32 %v1317, %v1420
          %v1453 = vsub.f32 %v1318, %v1421
          %v1454 = vsub.f32 %v1319, %v1422
          %v1455 = vsub.f32 %v1320, %v1423
          %v1456 = vsub.f32 %v1321, %v1424
          %v1457 = vmul.f32 %v1425, %v1425
          %v1458 = vmul.f32 %v1426, %v1426
          %v1459 = vmul.f32 %v1427, %v1427
          %v1460 = vmul.f32 %v1428, %v1428
          %v1461 = vmul.f32 %v1429, %v1429
          %v1462 = vmul.f32 %v1430, %v1430
          %v1463 = vmul.f32 %v1431, %v1431
          %v1464 = vmul.f32 %v1432, %v1432
          %v1465 = vmul.f32 %v1433, %v1433
          %v1466 = vmul.f32 %v1434, %v1434
          %v1467 = vmul.f32 %v1435, %v1435
          %v1468 = vmul.f32 %v1436, %v1436
          %v1469 = vmul.f32 %v1437, %v1437
          %v1470 = vmul.f32 %v1438, %v1438
          %v1471 = vmul.f32 %v1439, %v1439
          %v1472 = vmul.f32 %v1440, %v1440
          %v1473 = vmul.f32 %v1441, %v1441
          %v1474 = vmul.f32 %v1442, %v1442
          %v1475 = vmul.f32 %v1443, %v1443
          %v1476 = vmul.f32 %v1444, %v1444
          %v1477 = vmul.f32 %v1445, %v1445
          %v1478 = vmul.f32 %v1446, %v1446
          %v1479 = vmul.f32 %v1447, %v1447
          %v1480 = vmul.f32 %v1448, %v1448
          %v1481 = vmul.f32 %v1449, %v1449
          %v1482 = vmul.f32 %v1450, %v1450
          %v1483 = vmul.f32 %v1451, %v1451
          %v1484 = vmul.f32 %v1452, %v1452
          %v1485 = vmul.f32 %v1453, %v1453
          %v1486 = vmul.f32 %v1454, %v1454
          %v1487 = vmul.f32 %v1455, %v1455
          %v1488 = vmul.f32 %v1456, %v1456
          %1489 = vadd.xlane.f32.xlu0 %v1457
          %v1490 = vpop.xlane.xlu0 %1489
          %1491 = vadd.xlane.f32.xlu0 %v1458
          %v1492 = vpop.xlane.xlu0 %1491
          %1493 = vadd.xlane.f32.xlu0 %v1459
          %v1494 = vpop.xlane.xlu0 %1493
          %1495 = vadd.xlane.f32.xlu0 %v1460
          %v1496 = vpop.xlane.xlu0 %1495
          %1497 = vadd.xlane.f32.xlu0 %v1461
          %v1498 = vpop.xlane.xlu0 %1497
          %1499 = vadd.xlane.f32.xlu0 %v1462
          %v1500 = vpop.xlane.xlu0 %1499
          %1501 = vadd.xlane.f32.xlu0 %v1463
          %v1502 = vpop.xlane.xlu0 %1501
          %1503 = vadd.xlane.f32.xlu0 %v1464
          %v1504 = vpop.xlane.xlu0 %1503
          %1505 = vadd.xlane.f32.xlu0 %v1465
          %v1506 = vpop.xlane.xlu0 %1505
          %1507 = vadd.xlane.f32.xlu0 %v1466
          %v1508 = vpop.xlane.xlu0 %1507
          %1509 = vadd.xlane.f32.xlu0 %v1467
          %v1510 = vpop.xlane.xlu0 %1509
          %1511 = vadd.xlane.f32.xlu0 %v1468
          %v1512 = vpop.xlane.xlu0 %1511
          %1513 = vadd.xlane.f32.xlu0 %v1469
          %v1514 = vpop.xlane.xlu0 %1513
          %1515 = vadd.xlane.f32.xlu0 %v1470
          %v1516 = vpop.xlane.xlu0 %1515
          %1517 = vadd.xlane.f32.xlu0 %v1471
          %v1518 = vpop.xlane.xlu0 %1517
          %1519 = vadd.xlane.f32.xlu0 %v1472
          %v1520 = vpop.xlane.xlu0 %1519
          %1521 = vadd.xlane.f32.xlu0 %v1473
          %v1522 = vpop.xlane.xlu0 %1521
          %1523 = vadd.xlane.f32.xlu0 %v1474
          %v1524 = vpop.xlane.xlu0 %1523
          %1525 = vadd.xlane.f32.xlu0 %v1475
          %v1526 = vpop.xlane.xlu0 %1525
          %1527 = vadd.xlane.f32.xlu0 %v1476
          %v1528 = vpop.xlane.xlu0 %1527
          %1529 = vadd.xlane.f32.xlu0 %v1477
          %v1530 = vpop.xlane.xlu0 %1529
          %1531 = vadd.xlane.f32.xlu0 %v1478
          %v1532 = vpop.xlane.xlu0 %1531
          %1533 = vadd.xlane.f32.xlu0 %v1479
          %v1534 = vpop.xlane.xlu0 %1533
          %1535 = vadd.xlane.f32.xlu0 %v1480
          %v1536 = vpop.xlane.xlu0 %1535
          %1537 = vadd.xlane.f32.xlu0 %v1481
          %v1538 = vpop.xlane.xlu0 %1537
          %1539 = vadd.xlane.f32.xlu0 %v1482
          %v1540 = vpop.xlane.xlu0 %1539
          %1541 = vadd.xlane.f32.xlu0 %v1483
          %v1542 = vpop.xlane.xlu0 %1541
          %1543 = vadd.xlane.f32.xlu0 %v1484
          %v1544 = vpop.xlane.xlu0 %1543
          %1545 = vadd.xlane.f32.xlu0 %v1485
          %v1546 = vpop.xlane.xlu0 %1545
          %1547 = vadd.xlane.f32.xlu0 %v1486
          %v1548 = vpop.xlane.xlu0 %1547
          %1549 = vadd.xlane.f32.xlu0 %v1487
          %v1550 = vpop.xlane.xlu0 %1549
          %1551 = vadd.xlane.f32.xlu0 %v1488
          %v1552 = vpop.xlane.xlu0 %1551
          %v1553 = vmul.f32 %v1490, %v1392
          %v1554 = vmul.f32 %v1492, %v1392
          %v1555 = vmul.f32 %v1494, %v1392
          %v1556 = vmul.f32 %v1496, %v1392
          %v1557 = vmul.f32 %v1498, %v1392
          %v1558 = vmul.f32 %v1500, %v1392
          %v1559 = vmul.f32 %v1502, %v1392
          %v1560 = vmul.f32 %v1504, %v1392
          %v1561 = vmul.f32 %v1506, %v1392
          %v1562 = vmul.f32 %v1508, %v1392
          %v1563 = vmul.f32 %v1510, %v1392
          %v1564 = vmul.f32 %v1512, %v1392
          %v1565 = vmul.f32 %v1514, %v1392
          %v1566 = vmul.f32 %v1516, %v1392
          %v1567 = vmul.f32 %v1518, %v1392
          %v1568 = vmul.f32 %v1520, %v1392
          %v1569 = vmul.f32 %v1522, %v1392
          %v1570 = vmul.f32 %v1524, %v1392
          %v1571 = vmul.f32 %v1526, %v1392
          %v1572 = vmul.f32 %v1528, %v1392
          %v1573 = vmul.f32 %v1530, %v1392
          %v1574 = vmul.f32 %v1532, %v1392
          %v1575 = vmul.f32 %v1534, %v1392
          %v1576 = vmul.f32 %v1536, %v1392
          %v1577 = vmul.f32 %v1538, %v1392
          %v1578 = vmul.f32 %v1540, %v1392
          %v1579 = vmul.f32 %v1542, %v1392
          %v1580 = vmul.f32 %v1544, %v1392
          %v1581 = vmul.f32 %v1546, %v1392
          %v1582 = vmul.f32 %v1548, %v1392
          %v1583 = vmul.f32 %v1550, %v1392
          %v1584 = vmul.f32 %v1552, %v1392
          %v1585 = vadd.f32 %v1553, 1e-06
          %v1586 = vadd.f32 %v1554, 1e-06
          %v1587 = vadd.f32 %v1555, 1e-06
          %v1588 = vadd.f32 %v1556, 1e-06
          %v1589 = vadd.f32 %v1557, 1e-06
          %v1590 = vadd.f32 %v1558, 1e-06
          %v1591 = vadd.f32 %v1559, 1e-06
          %v1592 = vadd.f32 %v1560, 1e-06
          %v1593 = vadd.f32 %v1561, 1e-06
          %v1594 = vadd.f32 %v1562, 1e-06
          %v1595 = vadd.f32 %v1563, 1e-06
          %v1596 = vadd.f32 %v1564, 1e-06
          %v1597 = vadd.f32 %v1565, 1e-06
          %v1598 = vadd.f32 %v1566, 1e-06
          %v1599 = vadd.f32 %v1567, 1e-06
          %v1600 = vadd.f32 %v1568, 1e-06
          %v1601 = vadd.f32 %v1569, 1e-06
          %v1602 = vadd.f32 %v1570, 1e-06
          %v1603 = vadd.f32 %v1571, 1e-06
          %v1604 = vadd.f32 %v1572, 1e-06
          %v1605 = vadd.f32 %v1573, 1e-06
          %v1606 = vadd.f32 %v1574, 1e-06
          %v1607 = vadd.f32 %v1575, 1e-06
          %v1608 = vadd.f32 %v1576, 1e-06
          %v1609 = vadd.f32 %v1577, 1e-06
          %v1610 = vadd.f32 %v1578, 1e-06
          %v1611 = vadd.f32 %v1579, 1e-06
          %v1612 = vadd.f32 %v1580, 1e-06
          %v1613 = vadd.f32 %v1581, 1e-06
          %v1614 = vadd.f32 %v1582, 1e-06
          %v1615 = vadd.f32 %v1583, 1e-06
          %v1616 = vadd.f32 %v1584, 1e-06
          %v1617 = vrsqrt.pop %v1585
          %v1618 = vmul.f32 %v1617, %v1585
          %v1619 = vmul.f32 %v1618, %v1617
          %v1620 = vmul.f32 0.5, %v1619
          %v1621 = vsub.f32 1.5, %v1620
          %v1622 = vmul.f32 %v1617, %v1621
          %vm1623 = vweird.f32 %v1585
          %vm1624 = vweird.f32 %v1617
          %vm1625 = vmor %vm1623, %vm1624
          %v1626 = vsel %vm1625, %v1617, %v1622
          %v1627 = vrsqrt.pop %v1586
          %v1628 = vmul.f32 %v1627, %v1586
          %v1629 = vmul.f32 %v1628, %v1627
          %v1630 = vmul.f32 0.5, %v1629
          %v1631 = vsub.f32 1.5, %v1630
          %v1632 = vmul.f32 %v1627, %v1631
          %vm1633 = vweird.f32 %v1586
          %vm1634 = vweird.f32 %v1627
          %vm1635 = vmor %vm1633, %vm1634
          %v1636 = vsel %vm1635, %v1627, %v1632
          %v1637 = vrsqrt.pop %v1587
          %v1638 = vmul.f32 %v1637, %v1587
          %v1639 = vmul.f32 %v1638, %v1637
          %v1640 = vmul.f32 0.5, %v1639
          %v1641 = vsub.f32 1.5, %v1640
          %v1642 = vmul.f32 %v1637, %v1641
          %vm1643 = vweird.f32 %v1587
          %vm1644 = vweird.f32 %v1637
          %vm1645 = vmor %vm1643, %vm1644
          %v1646 = vsel %vm1645, %v1637, %v1642
          %v1647 = vrsqrt.pop %v1588
          %v1648 = vmul.f32 %v1647, %v1588
          %v1649 = vmul.f32 %v1648, %v1647
          %v1650 = vmul.f32 0.5, %v1649
          %v1651 = vsub.f32 1.5, %v1650
          %v1652 = vmul.f32 %v1647, %v1651
          %vm1653 = vweird.f32 %v1588
          %vm1654 = vweird.f32 %v1647
          %vm1655 = vmor %vm1653, %vm1654
          %v1656 = vsel %vm1655, %v1647, %v1652
          %v1657 = vrsqrt.pop %v1589
          %v1658 = vmul.f32 %v1657, %v1589
          %v1659 = vmul.f32 %v1658, %v1657
          %v1660 = vmul.f32 0.5, %v1659
          %v1661 = vsub.f32 1.5, %v1660
          %v1662 = vmul.f32 %v1657, %v1661
          %vm1663 = vweird.f32 %v1589
          %vm1664 = vweird.f32 %v1657
          %vm1665 = vmor %vm1663, %vm1664
          %v1666 = vsel %vm1665, %v1657, %v1662
          %v1667 = vrsqrt.pop %v1590
          %v1668 = vmul.f32 %v1667, %v1590
          %v1669 = vmul.f32 %v1668, %v1667
          %v1670 = vmul.f32 0.5, %v1669
          %v1671 = vsub.f32 1.5, %v1670
          %v1672 = vmul.f32 %v1667, %v1671
          %vm1673 = vweird.f32 %v1590
          %vm1674 = vweird.f32 %v1667
          %vm1675 = vmor %vm1673, %vm1674
          %v1676 = vsel %vm1675, %v1667, %v1672
          %v1677 = vrsqrt.pop %v1591
          %v1678 = vmul.f32 %v1677, %v1591
          %v1679 = vmul.f32 %v1678, %v1677
          %v1680 = vmul.f32 0.5, %v1679
          %v1681 = vsub.f32 1.5, %v1680
          %v1682 = vmul.f32 %v1677, %v1681
          %vm1683 = vweird.f32 %v1591
          %vm1684 = vweird.f32 %v1677
          %vm1685 = vmor %vm1683, %vm1684
          %v1686 = vsel %vm1685, %v1677, %v1682
          %v1687 = vrsqrt.pop %v1592
          %v1688 = vmul.f32 %v1687, %v1592
          %v1689 = vmul.f32 %v1688, %v1687
          %v1690 = vmul.f32 0.5, %v1689
          %v1691 = vsub.f32 1.5, %v1690
          %v1692 = vmul.f32 %v1687, %v1691
          %vm1693 = vweird.f32 %v1592
          %vm1694 = vweird.f32 %v1687
          %vm1695 = vmor %vm1693, %vm1694
          %v1696 = vsel %vm1695, %v1687, %v1692
          %v1697 = vrsqrt.pop %v1593
          %v1698 = vmul.f32 %v1697, %v1593
          %v1699 = vmul.f32 %v1698, %v1697
          %v1700 = vmul.f32 0.5, %v1699
          %v1701 = vsub.f32 1.5, %v1700
          %v1702 = vmul.f32 %v1697, %v1701
          %vm1703 = vweird.f32 %v1593
          %vm1704 = vweird.f32 %v1697
          %vm1705 = vmor %vm1703, %vm1704
          %v1706 = vsel %vm1705, %v1697, %v1702
          %v1707 = vrsqrt.pop %v1594
          %v1708 = vmul.f32 %v1707, %v1594
          %v1709 = vmul.f32 %v1708, %v1707
          %v1710 = vmul.f32 0.5, %v1709
          %v1711 = vsub.f32 1.5, %v1710
          %v1712 = vmul.f32 %v1707, %v1711
          %vm1713 = vweird.f32 %v1594
          %vm1714 = vweird.f32 %v1707
          %vm1715 = vmor %vm1713, %vm1714
          %v1716 = vsel %vm1715, %v1707, %v1712
          %v1717 = vrsqrt.pop %v1595
          %v1718 = vmul.f32 %v1717, %v1595
          %v1719 = vmul.f32 %v1718, %v1717
          %v1720 = vmul.f32 0.5, %v1719
          %v1721 = vsub.f32 1.5, %v1720
          %v1722 = vmul.f32 %v1717, %v1721
          %vm1723 = vweird.f32 %v1595
          %vm1724 = vweird.f32 %v1717
          %vm1725 = vmor %vm1723, %vm1724
          %v1726 = vsel %vm1725, %v1717, %v1722
          %v1727 = vrsqrt.pop %v1596
          %v1728 = vmul.f32 %v1727, %v1596
          %v1729 = vmul.f32 %v1728, %v1727
          %v1730 = vmul.f32 0.5, %v1729
          %v1731 = vsub.f32 1.5, %v1730
          %v1732 = vmul.f32 %v1727, %v1731
          %vm1733 = vweird.f32 %v1596
          %vm1734 = vweird.f32 %v1727
          %vm1735 = vmor %vm1733, %vm1734
          %v1736 = vsel %vm1735, %v1727, %v1732
          %v1737 = vrsqrt.pop %v1597
          %v1738 = vmul.f32 %v1737, %v1597
          %v1739 = vmul.f32 %v1738, %v1737
          %v1740 = vmul.f32 0.5, %v1739
          %v1741 = vsub.f32 1.5, %v1740
          %v1742 = vmul.f32 %v1737, %v1741
          %vm1743 = vweird.f32 %v1597
          %vm1744 = vweird.f32 %v1737
          %vm1745 = vmor %vm1743, %vm1744
          %v1746 = vsel %vm1745, %v1737, %v1742
          %v1747 = vrsqrt.pop %v1598
          %v1748 = vmul.f32 %v1747, %v1598
          %v1749 = vmul.f32 %v1748, %v1747
          %v1750 = vmul.f32 0.5, %v1749
          %v1751 = vsub.f32 1.5, %v1750
          %v1752 = vmul.f32 %v1747, %v1751
          %vm1753 = vweird.f32 %v1598
          %vm1754 = vweird.f32 %v1747
          %vm1755 = vmor %vm1753, %vm1754
          %v1756 = vsel %vm1755, %v1747, %v1752
          %v1757 = vrsqrt.pop %v1599
          %v1758 = vmul.f32 %v1757, %v1599
          %v1759 = vmul.f32 %v1758, %v1757
          %v1760 = vmul.f32 0.5, %v1759
          %v1761 = vsub.f32 1.5, %v1760
          %v1762 = vmul.f32 %v1757, %v1761
          %vm1763 = vweird.f32 %v1599
          %vm1764 = vweird.f32 %v1757
          %vm1765 = vmor %vm1763, %vm1764
          %v1766 = vsel %vm1765, %v1757, %v1762
          %v1767 = vrsqrt.pop %v1600
          %v1768 = vmul.f32 %v1767, %v1600
          %v1769 = vmul.f32 %v1768, %v1767
          %v1770 = vmul.f32 0.5, %v1769
          %v1771 = vsub.f32 1.5, %v1770
          %v1772 = vmul.f32 %v1767, %v1771
          %vm1773 = vweird.f32 %v1600
          %vm1774 = vweird.f32 %v1767
          %vm1775 = vmor %vm1773, %vm1774
          %v1776 = vsel %vm1775, %v1767, %v1772
          %v1777 = vrsqrt.pop %v1601
          %v1778 = vmul.f32 %v1777, %v1601
          %v1779 = vmul.f32 %v1778, %v1777
          %v1780 = vmul.f32 0.5, %v1779
          %v1781 = vsub.f32 1.5, %v1780
          %v1782 = vmul.f32 %v1777, %v1781
          %vm1783 = vweird.f32 %v1601
          %vm1784 = vweird.f32 %v1777
          %vm1785 = vmor %vm1783, %vm1784
          %v1786 = vsel %vm1785, %v1777, %v1782
          %v1787 = vrsqrt.pop %v1602
          %v1788 = vmul.f32 %v1787, %v1602
          %v1789 = vmul.f32 %v1788, %v1787
          %v1790 = vmul.f32 0.5, %v1789
          %v1791 = vsub.f32 1.5, %v1790
          %v1792 = vmul.f32 %v1787, %v1791
          %vm1793 = vweird.f32 %v1602
          %vm1794 = vweird.f32 %v1787
          %vm1795 = vmor %vm1793, %vm1794
          %v1796 = vsel %vm1795, %v1787, %v1792
          %v1797 = vrsqrt.pop %v1603
          %v1798 = vmul.f32 %v1797, %v1603
          %v1799 = vmul.f32 %v1798, %v1797
          %v1800 = vmul.f32 0.5, %v1799
          %v1801 = vsub.f32 1.5, %v1800
          %v1802 = vmul.f32 %v1797, %v1801
          %vm1803 = vweird.f32 %v1603
          %vm1804 = vweird.f32 %v1797
          %vm1805 = vmor %vm1803, %vm1804
          %v1806 = vsel %vm1805, %v1797, %v1802
          %v1807 = vrsqrt.pop %v1604
          %v1808 = vmul.f32 %v1807, %v1604
          %v1809 = vmul.f32 %v1808, %v1807
          %v1810 = vmul.f32 0.5, %v1809
          %v1811 = vsub.f32 1.5, %v1810
          %v1812 = vmul.f32 %v1807, %v1811
          %vm1813 = vweird.f32 %v1604
          %vm1814 = vweird.f32 %v1807
          %vm1815 = vmor %vm1813, %vm1814
          %v1816 = vsel %vm1815, %v1807, %v1812
          %v1817 = vrsqrt.pop %v1605
          %v1818 = vmul.f32 %v1817, %v1605
          %v1819 = vmul.f32 %v1818, %v1817
          %v1820 = vmul.f32 0.5, %v1819
          %v1821 = vsub.f32 1.5, %v1820
          %v1822 = vmul.f32 %v1817, %v1821
          %vm1823 = vweird.f32 %v1605
          %vm1824 = vweird.f32 %v1817
          %vm1825 = vmor %vm1823, %vm1824
          %v1826 = vsel %vm1825, %v1817, %v1822
          %v1827 = vrsqrt.pop %v1606
          %v1828 = vmul.f32 %v1827, %v1606
          %v1829 = vmul.f32 %v1828, %v1827
          %v1830 = vmul.f32 0.5, %v1829
          %v1831 = vsub.f32 1.5, %v1830
          %v1832 = vmul.f32 %v1827, %v1831
          %vm1833 = vweird.f32 %v1606
          %vm1834 = vweird.f32 %v1827
          %vm1835 = vmor %vm1833, %vm1834
          %v1836 = vsel %vm1835, %v1827, %v1832
          %v1837 = vrsqrt.pop %v1607
          %v1838 = vmul.f32 %v1837, %v1607
          %v1839 = vmul.f32 %v1838, %v1837
          %v1840 = vmul.f32 0.5, %v1839
          %v1841 = vsub.f32 1.5, %v1840
          %v1842 = vmul.f32 %v1837, %v1841
          %vm1843 = vweird.f32 %v1607
          %vm1844 = vweird.f32 %v1837
          %vm1845 = vmor %vm1843, %vm1844
          %v1846 = vsel %vm1845, %v1837, %v1842
          %v1847 = vrsqrt.pop %v1608
          %v1848 = vmul.f32 %v1847, %v1608
          %v1849 = vmul.f32 %v1848, %v1847
          %v1850 = vmul.f32 0.5, %v1849
          %v1851 = vsub.f32 1.5, %v1850
          %v1852 = vmul.f32 %v1847, %v1851
          %vm1853 = vweird.f32 %v1608
          %vm1854 = vweird.f32 %v1847
          %vm1855 = vmor %vm1853, %vm1854
          %v1856 = vsel %vm1855, %v1847, %v1852
          %v1857 = vrsqrt.pop %v1609
          %v1858 = vmul.f32 %v1857, %v1609
          %v1859 = vmul.f32 %v1858, %v1857
          %v1860 = vmul.f32 0.5, %v1859
          %v1861 = vsub.f32 1.5, %v1860
          %v1862 = vmul.f32 %v1857, %v1861
          %vm1863 = vweird.f32 %v1609
          %vm1864 = vweird.f32 %v1857
          %vm1865 = vmor %vm1863, %vm1864
          %v1866 = vsel %vm1865, %v1857, %v1862
          %v1867 = vrsqrt.pop %v1610
          %v1868 = vmul.f32 %v1867, %v1610
          %v1869 = vmul.f32 %v1868, %v1867
          %v1870 = vmul.f32 0.5, %v1869
          %v1871 = vsub.f32 1.5, %v1870
          %v1872 = vmul.f32 %v1867, %v1871
          %vm1873 = vweird.f32 %v1610
          %vm1874 = vweird.f32 %v1867
          %vm1875 = vmor %vm1873, %vm1874
          %v1876 = vsel %vm1875, %v1867, %v1872
          %v1877 = vrsqrt.pop %v1611
          %v1878 = vmul.f32 %v1877, %v1611
          %v1879 = vmul.f32 %v1878, %v1877
          %v1880 = vmul.f32 0.5, %v1879
          %v1881 = vsub.f32 1.5, %v1880
          %v1882 = vmul.f32 %v1877, %v1881
          %vm1883 = vweird.f32 %v1611
          %vm1884 = vweird.f32 %v1877
          %vm1885 = vmor %vm1883, %vm1884
          %v1886 = vsel %vm1885, %v1877, %v1882
          %v1887 = vrsqrt.pop %v1612
          %v1888 = vmul.f32 %v1887, %v1612
          %v1889 = vmul.f32 %v1888, %v1887
          %v1890 = vmul.f32 0.5, %v1889
          %v1891 = vsub.f32 1.5, %v1890
          %v1892 = vmul.f32 %v1887, %v1891
          %vm1893 = vweird.f32 %v1612
          %vm1894 = vweird.f32 %v1887
          %vm1895 = vmor %vm1893, %vm1894
          %v1896 = vsel %vm1895, %v1887, %v1892
          %v1897 = vrsqrt.pop %v1613
          %v1898 = vmul.f32 %v1897, %v1613
          %v1899 = vmul.f32 %v1898, %v1897
          %v1900 = vmul.f32 0.5, %v1899
          %v1901 = vsub.f32 1.5, %v1900
          %v1902 = vmul.f32 %v1897, %v1901
          %vm1903 = vweird.f32 %v1613
          %vm1904 = vweird.f32 %v1897
          %vm1905 = vmor %vm1903, %vm1904
          %v1906 = vsel %vm1905, %v1897, %v1902
          %v1907 = vrsqrt.pop %v1614
          %v1908 = vmul.f32 %v1907, %v1614
          %v1909 = vmul.f32 %v1908, %v1907
          %v1910 = vmul.f32 0.5, %v1909
          %v1911 = vsub.f32 1.5, %v1910
          %v1912 = vmul.f32 %v1907, %v1911
          %vm1913 = vweird.f32 %v1614
          %vm1914 = vweird.f32 %v1907
          %vm1915 = vmor %vm1913, %vm1914
          %v1916 = vsel %vm1915, %v1907, %v1912
          %v1917 = vrsqrt.pop %v1615
          %v1918 = vmul.f32 %v1917, %v1615
          %v1919 = vmul.f32 %v1918, %v1917
          %v1920 = vmul.f32 0.5, %v1919
          %v1921 = vsub.f32 1.5, %v1920
          %v1922 = vmul.f32 %v1917, %v1921
          %vm1923 = vweird.f32 %v1615
          %vm1924 = vweird.f32 %v1917
          %vm1925 = vmor %vm1923, %vm1924
          %v1926 = vsel %vm1925, %v1917, %v1922
          %v1927 = vrsqrt.pop %v1616
          %v1928 = vmul.f32 %v1927, %v1616
          %v1929 = vmul.f32 %v1928, %v1927
          %v1930 = vmul.f32 0.5, %v1929
          %v1931 = vsub.f32 1.5, %v1930
          %v1932 = vmul.f32 %v1927, %v1931
          %vm1933 = vweird.f32 %v1616
          %vm1934 = vweird.f32 %v1927
          %vm1935 = vmor %vm1933, %vm1934
          %v1936 = vsel %vm1935, %v1927, %v1932
          %v1937 = vmul.f32 %v1425, %v1626
          %v1938 = vmul.f32 %v1426, %v1636
          %v1939 = vmul.f32 %v1427, %v1646
          %v1940 = vmul.f32 %v1428, %v1656
          %v1941 = vmul.f32 %v1429, %v1666
          %v1942 = vmul.f32 %v1430, %v1676
          %v1943 = vmul.f32 %v1431, %v1686
          %v1944 = vmul.f32 %v1432, %v1696
          %v1945 = vmul.f32 %v1433, %v1706
          %v1946 = vmul.f32 %v1434, %v1716
          %v1947 = vmul.f32 %v1435, %v1726
          %v1948 = vmul.f32 %v1436, %v1736
          %v1949 = vmul.f32 %v1437, %v1746
          %v1950 = vmul.f32 %v1438, %v1756
          %v1951 = vmul.f32 %v1439, %v1766
          %v1952 = vmul.f32 %v1440, %v1776
          %v1953 = vmul.f32 %v1441, %v1786
          %v1954 = vmul.f32 %v1442, %v1796
          %v1955 = vmul.f32 %v1443, %v1806
          %v1956 = vmul.f32 %v1444, %v1816
          %v1957 = vmul.f32 %v1445, %v1826
          %v1958 = vmul.f32 %v1446, %v1836
          %v1959 = vmul.f32 %v1447, %v1846
          %v1960 = vmul.f32 %v1448, %v1856
          %v1961 = vmul.f32 %v1449, %v1866
          %v1962 = vmul.f32 %v1450, %v1876
          %v1963 = vmul.f32 %v1451, %v1886
          %v1964 = vmul.f32 %v1452, %v1896
          %v1965 = vmul.f32 %v1453, %v1906
          %v1966 = vmul.f32 %v1454, %v1916
          %v1967 = vmul.f32 %v1455, %v1926
          %v1968 = vmul.f32 %v1456, %v1936
          %v1969 = vld [vmem:[%s5] sm:$0x1]
          %v1971 = vperm.slane %v1969, 0
          %v1973 = vmul.f32 %v1937, %v1971
          %v1974 = vmul.f32 %v1938, %v1971
          %v1975 = vmul.f32 %v1939, %v1971
          %v1976 = vmul.f32 %v1940, %v1971
          %v1977 = vmul.f32 %v1941, %v1971
          %v1978 = vmul.f32 %v1942, %v1971
          %v1979 = vmul.f32 %v1943, %v1971
          %v1980 = vmul.f32 %v1944, %v1971
          %v1981 = vmul.f32 %v1945, %v1971
          %v1982 = vmul.f32 %v1946, %v1971
          %v1983 = vmul.f32 %v1947, %v1971
          %v1984 = vmul.f32 %v1948, %v1971
          %v1985 = vmul.f32 %v1949, %v1971
          %v1986 = vmul.f32 %v1950, %v1971
          %v1987 = vmul.f32 %v1951, %v1971
          %v1988 = vmul.f32 %v1952, %v1971
          %v1989 = vmul.f32 %v1953, %v1971
          %v1990 = vmul.f32 %v1954, %v1971
          %v1991 = vmul.f32 %v1955, %v1971
          %v1992 = vmul.f32 %v1956, %v1971
          %v1993 = vmul.f32 %v1957, %v1971
          %v1994 = vmul.f32 %v1958, %v1971
          %v1995 = vmul.f32 %v1959, %v1971
          %v1996 = vmul.f32 %v1960, %v1971
          %v1997 = vmul.f32 %v1961, %v1971
          %v1998 = vmul.f32 %v1962, %v1971
          %v1999 = vmul.f32 %v1963, %v1971
          %v2000 = vmul.f32 %v1964, %v1971
          %v2001 = vmul.f32 %v1965, %v1971
          %v2002 = vmul.f32 %v1966, %v1971
          %v2003 = vmul.f32 %v1967, %v1971
          %v2004 = vmul.f32 %v1968, %v1971
          %v2005 = vld [vmem:[%s6] sm:$0x1]
          %v2007 = vperm.slane %v2005, 0
          %v2009 = vadd.f32 %v1973, %v2007
          %v2010 = vadd.f32 %v1974, %v2007
          %v2011 = vadd.f32 %v1975, %v2007
          %v2012 = vadd.f32 %v1976, %v2007
          %v2013 = vadd.f32 %v1977, %v2007
          %v2014 = vadd.f32 %v1978, %v2007
          %v2015 = vadd.f32 %v1979, %v2007
          %v2016 = vadd.f32 %v1980, %v2007
          %v2017 = vadd.f32 %v1981, %v2007
          %v2018 = vadd.f32 %v1982, %v2007
          %v2019 = vadd.f32 %v1983, %v2007
          %v2020 = vadd.f32 %v1984, %v2007
          %v2021 = vadd.f32 %v1985, %v2007
          %v2022 = vadd.f32 %v1986, %v2007
          %v2023 = vadd.f32 %v1987, %v2007
          %v2024 = vadd.f32 %v1988, %v2007
          %v2025 = vadd.f32 %v1989, %v2007
          %v2026 = vadd.f32 %v1990, %v2007
          %v2027 = vadd.f32 %v1991, %v2007
          %v2028 = vadd.f32 %v1992, %v2007
          %v2029 = vadd.f32 %v1993, %v2007
          %v2030 = vadd.f32 %v1994, %v2007
          %v2031 = vadd.f32 %v1995, %v2007
          %v2032 = vadd.f32 %v1996, %v2007
          %v2033 = vadd.f32 %v1997, %v2007
          %v2034 = vadd.f32 %v1998, %v2007
          %v2035 = vadd.f32 %v1999, %v2007
          %v2036 = vadd.f32 %v2000, %v2007
          %v2037 = vadd.f32 %v2001, %v2007
          %v2038 = vadd.f32 %v2002, %v2007
          %v2039 = vadd.f32 %v2003, %v2007
          %v2040 = vadd.f32 %v2004, %v2007
          %2041 = vst [vmem:[%s430] sm:$0xff] %v2009
          %2042 = vst [vmem:[%s430 + $0x8] sm:$0xff] %v2010
          %2043 = vst [vmem:[%s430 + $0x10] sm:$0xff] %v2011
          %2044 = vst [vmem:[%s430 + $0x18] sm:$0xff] %v2012
          %2045 = vst [vmem:[%s430 + $0x20] sm:$0xff] %v2013
          %2046 = vst [vmem:[%s430 + $0x28] sm:$0xff] %v2014
          %2047 = vst [vmem:[%s430 + $0x30] sm:$0xff] %v2015
          %2048 = vst [vmem:[%s430 + $0x38] sm:$0xff] %v2016
          %2049 = vst [vmem:[%s430 + $0x40] sm:$0xff] %v2017
          %2050 = vst [vmem:[%s430 + $0x48] sm:$0xff] %v2018
          %2051 = vst [vmem:[%s430 + $0x50] sm:$0xff] %v2019
          %2052 = vst [vmem:[%s430 + $0x58] sm:$0xff] %v2020
          %2053 = vst [vmem:[%s430 + $0x60] sm:$0xff] %v2021
          %2054 = vst [vmem:[%s430 + $0x68] sm:$0xff] %v2022
          %2055 = vst [vmem:[%s430 + $0x70] sm:$0xff] %v2023
          %2056 = vst [vmem:[%s430 + $0x78] sm:$0xff] %v2024
          %2057 = vst [vmem:[%s430 + $0x80] sm:$0xff] %v2025
          %2058 = vst [vmem:[%s430 + $0x88] sm:$0xff] %v2026
          %2059 = vst [vmem:[%s430 + $0x90] sm:$0xff] %v2027
          %2060 = vst [vmem:[%s430 + $0x98] sm:$0xff] %v2028
          %2061 = vst [vmem:[%s430 + $0xa0] sm:$0xff] %v2029
          %2062 = vst [vmem:[%s430 + $0xa8] sm:$0xff] %v2030
          %2063 = vst [vmem:[%s430 + $0xb0] sm:$0xff] %v2031
          %2064 = vst [vmem:[%s430 + $0xb8] sm:$0xff] %v2032
          %2065 = vst [vmem:[%s430 + $0xc0] sm:$0xff] %v2033
          %2066 = vst [vmem:[%s430 + $0xc8] sm:$0xff] %v2034
          %2067 = vst [vmem:[%s430 + $0xd0] sm:$0xff] %v2035
          %2068 = vst [vmem:[%s430 + $0xd8] sm:$0xff] %v2036
          %2069 = vst [vmem:[%s430 + $0xe0] sm:$0xff] %v2037
          %2070 = vst [vmem:[%s430 + $0xe8] sm:$0xff] %v2038
          %2071 = vst [vmem:[%s430 + $0xf0] sm:$0xff] %v2039
          %2072 = vst [vmem:[%s430 + $0xf8] sm:$0xff] %v2040
        $region72: #{tpu_custom_call.1} parent=47 // pred_fallthru
          _
        %s2073 = sand.u32 %s217, 1
        %s2074 = scalar_lea.sflag [#allocation5], %s2073
        %s2075 = sand.u32 %s217, 1
        %s2076 = smul.addr %s2075, 256
        %s2077 = scalar_lea.vmem [#allocation11], %s2076
        // Predicated region
        $region73: #{tpu_custom_call.1} parent=47 // pred_check
          %p2078 = pneg %p227
        $region74: #{tpu_custom_call.1} parent=47 // pred_check_branch
          %2080 = sbr.rel (%p2078) target = $region76
        $region75: #{tpu_custom_call.1} parent=47 // pred_region
          %s2081 = smul.u32 32, %s34
          %2083 = vsyncadd %s2074, 0
          %s2084 = smul.addr %s2081, 8
          %s2085 = scalar_lea.hbm %s7, %s2084
          %s2086 = sshll.u32 %s2077, 4
          %s2087 = int_to_ptr.vmem [resolvable:$true] %s2086
          %s2088 = sshll.u32 %s2085, 4
          %s2089 = int_to_ptr.hbm [resolvable:$true] %s2088
          %2094 = dma.vmem_to_hbm [thread:$0]  %s2087, 4096, %s2089, %s2074, 128, 128, 8
        $region76: #{tpu_custom_call.1} parent=47 // pred_fallthru
          _
      $region48: #{tpu_custom_call.1} parent=5 // pred_fallthru
        _
      %p2095 = scmp.le.s32.totalorder 2, %s25
      // Predicated region
      $region77: #{tpu_custom_call.1} parent=5 // pred_check
        %p2096 = pneg %p2095
      $region78: #{tpu_custom_call.1} parent=5 // pred_check_branch
        %2098 = sbr.rel (%p2096) target = $region80
      $region79: #{tpu_custom_call.1} parent=5 // pred_region
        %s2099 = ssub.s32 %s25, 2
        // Predicated region
        $region81: #{tpu_custom_call.1} parent=79 // pred_check
          %p2100 = pneg %p233
        $region82: #{tpu_custom_call.1} parent=79 // pred_check_branch
          %2102 = sbr.rel (%p2100) target = $region84
        $region83: #{tpu_custom_call.1} parent=79 // pred_region
          %s2103 = sand.u32 %s218, 1
          %s2104 = scalar_lea.sflag [#allocation5], %s2103
          %s2105 = sand.u32 %s218, 1
          %s2106 = smul.addr %s2105, 256
          %s2107 = scalar_lea.vmem [#allocation11], %s2106
          %2109 = dma.done %s2104, 4096
        $region84: #{tpu_custom_call.1} parent=79 // pred_fallthru
          _
      $region80: #{tpu_custom_call.1} parent=5 // pred_fallthru
        _
    $region6: #{tpu_custom_call.1} parent=1 // loop_footer
      %s29 = sadd.s32 1, %s25
    $region7: #{tpu_custom_call.1} parent=1 // loop_footer_branch
      %24 = sbr.rel target = $region3
    $region8: #{tpu_custom_call.1} parent=1 // loop_exit
      _
    %2110 = vsyncpa [#allocation4], 1
    %s2111 = scalar_lea.sflag [#allocation4], 1
    %2112 = vsyncpa %s2111, 1
    %2113 = vsyncpa [#allocation7], 1
    %s2114 = scalar_lea.sflag [#allocation7], 1
    %2115 = vsyncpa %s2114, 1
    %2116 = vsyncpa [#allocation10], 1
    %s2117 = scalar_lea.sflag [#allocation10], 1
    %2118 = vsyncpa %s2117, 1
    %2119 = vsyncpa [#allocation5], 1
    %s2120 = scalar_lea.sflag [#allocation5], 1
    %2121 = vsyncpa %s2120, 1

</llo_original>
